<compile_context>
chip_gen: v7x
topology: tpu7x:2x2x1
jax: 0.10.0
libtpu: 0.0.40
codegen_flags: <defaults>
</compile_context>

<pallas_src>
from functools import partial

import jax
import jax.numpy as jnp
from jax import lax
from jax.experimental import pallas as pl
from jax.experimental.pallas import tpu as pltpu


def attention_kernel(x_ref, wqkv_ref, bqkv_ref, cos_q_ref, sin_q_ref,
                     cos_k_ref, sin_k_ref, wproj_ref, bproj_ref,
                     o_ref, acc_ref, *, head_dim):
    # Grid: (batch, head).  One head of one batch element per step.
    h = pl.program_id(1)
    last_h = pl.num_programs(1) - 1
    half = head_dim // 2
    io_dtype = x_ref.dtype

    x = x_ref[0]                                    # (N, D), native dtype
    wqkv_h = wqkv_ref[...]                          # (D, 3*Hd) this head's cols
    bqkv_h = bqkv_ref[0, 0].astype(jnp.float32)     # (3*Hd,)

    # Per-head QKV projection on the MXU (f32 accumulation, native operands).
    qkv = (jnp.dot(x, wqkv_h, preferred_element_type=jnp.float32)
           + bqkv_h[None, :]).astype(io_dtype)      # (N, 3*Hd)

    q = qkv[:, :head_dim]                           # (N, Hd)
    k = qkv[:, head_dim:2 * head_dim]               # (N, Hd)
    v = qkv[:, 2 * head_dim:]                       # (N, Hd)

    def rope(t, c, s):
        # rotate-half via the XLU roll slot:
        #   roll(t, half)[:, :half] == t[:, half:],  [:, half:] == t[:, :half]
        # so  t*c + roll(t)*s  ==  [t1*cos - t2*sin | t2*cos + t1*sin].
        return t * c + pltpu.roll(t, half, 1) * s

    # q-side tables carry the 1/sqrt(head_dim) scale (folded at the wrapper);
    # tables are already in io_dtype so RoPE runs in a single dtype.
    q_r = rope(q, cos_q_ref[...], sin_q_ref[...])
    k_r = rope(k, cos_k_ref[...], sin_k_ref[...])

    # q_r @ k_r^T without an explicit transpose: contract the last dims.
    s_scores = lax.dot_general(q_r, k_r, (((1,), (1,)), ((), ())),
                               preferred_element_type=jnp.float32)   # (N, N)

    m = jnp.max(s_scores, axis=-1, keepdims=True)
    p = jnp.exp(s_scores - m)                                        # unnormalized
    inv_l = pl.reciprocal(jnp.sum(p, axis=-1, keepdims=True), approx=True)

    # Fold the softmax reciprocal into the (N, Hd) output instead of the
    # (N, N) probabilities (head_dim/N fewer VPU multiplies).
    out_h = jnp.dot(p.astype(io_dtype), v, preferred_element_type=jnp.float32)
    out_h = (out_h * inv_l).astype(io_dtype)                         # (N, Hd)

    # This head's slice of the output projection (contraction = head_dim),
    # accumulated in f32 across the head grid axis.
    contrib = jnp.dot(out_h, wproj_ref[...],
                      preferred_element_type=jnp.float32)            # (N, D)

    @pl.when(h == 0)
    def _():
        acc_ref[...] = jnp.broadcast_to(
            bproj_ref[0].astype(jnp.float32)[None, :], acc_ref.shape)

    acc_ref[...] += contrib

    @pl.when(h == last_h)
    def _():
        o_ref[0] = acc_ref[...].astype(o_ref.dtype)


def rope_tables_half(n_tokens, head_dim, base=10000.0):
    half = head_dim // 2
    inv_freq = 1.0 / (base ** (jnp.arange(half, dtype=jnp.float32) / half))
    pos = jnp.arange(n_tokens, dtype=jnp.float32)
    ang = pos[:, None] * inv_freq[None, :]                   # (N, half)
    return jnp.cos(ang), jnp.sin(ang)


def _pick_vmem_limit_bytes():
    """Per-generation VMEM limit: ~3/4 of physical, capped at 100 MiB."""
    cap = None
    try:
        cap = getattr(pltpu.get_tpu_info(), "vmem_capacity_bytes", None)
    except Exception:
        cap = None
    if not cap:
        cap = 128 * 1024 * 1024
    return min((int(cap) * 3) // 4, 100 * 1024 * 1024)


def attention(x, w_qkv, b_qkv, w_proj, b_proj, *, n_heads):
    B, N, D = x.shape
    assert D % n_heads == 0
    head_dim = D // n_heads
    assert head_dim % 2 == 0
    # Weights must be pre-transposed to (in_features, out_features).
    assert w_qkv.shape == (D, 3 * D), "w_qkv must be (D, 3D) [pre-transposed]"
    assert w_proj.shape == (D, D), "w_proj must be (D, D) [pre-transposed]"
    scale = head_dim ** (-0.5)

    # Re-order QKV weight/bias columns so each head's [q|k|v] block is
    # contiguous: column layout [3, H, Hd] -> [H, 3, Hd].
    w_qkv_r = (w_qkv.reshape(D, 3, n_heads, head_dim)
               .transpose(0, 2, 1, 3).reshape(D, 3 * D))
    b_qkv_r = (b_qkv.reshape(3, n_heads, head_dim)
               .transpose(1, 0, 2).reshape(n_heads, 1, 3 * head_dim))

    # Full-width, lane-dense RoPE tables in the I/O dtype; attention scale is
    # folded into the q-side tables:
    #   rope(t) = t * [cos|cos] + roll(t, half) * [-sin|sin]
    cos_h, sin_h = rope_tables_half(N, head_dim)
    cos_full = jnp.concatenate([cos_h, cos_h], axis=-1)       # (N, Hd)
    sin_signed = jnp.concatenate([-sin_h, sin_h], axis=-1)    # (N, Hd)
    cos_q = (cos_full * scale).astype(x.dtype)
    sin_q = (sin_signed * scale).astype(x.dtype)
    cos_k = cos_full.astype(x.dtype)
    sin_k = sin_signed.astype(x.dtype)

    kernel = partial(attention_kernel, head_dim=head_dim)
    tbl_spec = lambda: pl.BlockSpec((N, head_dim), lambda b, h: (0, 0),
                                    pipeline_mode=pl.Buffered(1))

    return pl.pallas_call(
        kernel,
        out_shape=jax.ShapeDtypeStruct((B, N, D), x.dtype),
        grid_spec=pltpu.PrefetchScalarGridSpec(
            num_scalar_prefetch=0,
            grid=(B, n_heads),
            in_specs=[
                pl.BlockSpec((1, N, D), lambda b, h: (b, 0, 0)),            # x
                pl.BlockSpec((D, 3 * head_dim), lambda b, h: (0, h)),       # W_qkv cols of head h
                pl.BlockSpec((1, 1, 3 * head_dim), lambda b, h: (h, 0, 0)), # b_qkv of head h
                tbl_spec(),                                                  # cos_q (scaled)
                tbl_spec(),                                                  # sin_q (scaled, signed)
                tbl_spec(),                                                  # cos_k
                tbl_spec(),                                                  # sin_k (signed)
                pl.BlockSpec((head_dim, D), lambda b, h: (h, 0)),           # W_proj rows of head h
                pl.BlockSpec((1, D), lambda b, h: (0, 0),
                             pipeline_mode=pl.Buffered(1)),                 # b_proj
            ],
            out_specs=pl.BlockSpec((1, N, D), lambda b, h: (b, 0, 0)),
            scratch_shapes=[pltpu.VMEM((N, D), jnp.float32)],               # proj accumulator
        ),
        compiler_params=pltpu.CompilerParams(
            dimension_semantics=("parallel", "arbitrary"),
            vmem_limit_bytes=_pick_vmem_limit_bytes(),
        ),
    )(x, w_qkv_r, b_qkv_r, cos_q, sin_q, cos_k, sin_k, w_proj, b_proj)


def attention_ref(x, w_qkv, b_qkv, w_proj, b_proj, *, n_heads):
    """Pure-JAX reference mirroring the PyTorch forward (dropout p=0)."""
    B, N, D = x.shape
    head_dim = D // n_heads
    half = head_dim // 2
    scale = head_dim ** (-0.5)
    cos, sin = rope_tables_half(N, head_dim)

    qkv = x @ w_qkv + b_qkv                                    # (B, N, 3D)
    qkv = qkv.reshape(B, N, 3, n_heads, head_dim).transpose(2, 0, 3, 1, 4)
    q, k, v = qkv[0], qkv[1], qkv[2]                           # (B, H, N, Hd)

    def rope(t):
        t1, t2 = t[..., :half], t[..., half:]
        return jnp.concatenate([t1 * cos - t2 * sin,
                                t2 * cos + t1 * sin], axis=-1)

    q, k = rope(q), rope(k)
    dp = jnp.einsum('bhqd,bhkd->bhqk', q, k) * scale
    attn = jax.nn.softmax(dp, axis=-1)
    wavg = jnp.einsum('bhqk,bhkd->bhqd', attn, v)              # (B, H, N, Hd)
    wavg = wavg.transpose(0, 2, 1, 3).reshape(B, N, D)
    return wavg @ w_proj + b_proj


if __name__ == "__main__":
    # Small but lane-dense shapes: head_dim = 128 keeps every head slice,
    # RoPE table and store unmasked on the 128-lane vregs.
    B, N, D, H = 2, 16, 256, 2   # batch, tokens, dim, heads (head_dim = 128)

    key = jax.random.PRNGKey(0)
    kx, kw1, kb1, kw2, kb2 = jax.random.split(key, 5)

    x = jax.random.normal(kx, (B, N, D), dtype=jnp.float32)
    w_qkv = jax.random.normal(kw1, (D, 3 * D), dtype=jnp.float32) * 0.05
    b_qkv = jax.random.normal(kb1, (1, 3 * D), dtype=jnp.float32) * 0.05
    w_proj = jax.random.normal(kw2, (D, D), dtype=jnp.float32) * 0.05
    b_proj = jax.random.normal(kb2, (1, D), dtype=jnp.float32) * 0.05

    out = attention(x, w_qkv, b_qkv, w_proj, b_proj, n_heads=H)
    out = jax.block_until_ready(out)

    with jax.default_matmul_precision("highest"):
        ref = attention_ref(x, w_qkv, b_qkv[0], w_proj, b_proj[0], n_heads=H)

    assert out.shape == (B, N, D)
    max_err = float(jnp.max(jnp.abs(out - ref)))
    # Tolerance covers the approximate (EUP) softmax reciprocal.
    assert jnp.allclose(out, ref, atol=1e-2, rtol=1e-2), \
        f"mismatch vs reference (max abs err {max_err})"

    print("KERNEL_OK")
</pallas_src>

<mosaic_0001>
module attributes {stable_mosaic.version = 11 : i64} {
  func.func @attention_kernel(%arg0: i32, %arg1: i32, %arg2: memref<1x16x256xf32, #tpu.memory_space<vmem>>, %arg3: memref<256x384xf32, #tpu.memory_space<vmem>>, %arg4: memref<1x1x384xf32, #tpu.memory_space<vmem>>, %arg5: memref<16x128xf32, #tpu.memory_space<vmem>>, %arg6: memref<16x128xf32, #tpu.memory_space<vmem>>, %arg7: memref<16x128xf32, #tpu.memory_space<vmem>>, %arg8: memref<16x128xf32, #tpu.memory_space<vmem>>, %arg9: memref<128x256xf32, #tpu.memory_space<vmem>>, %arg10: memref<1x256xf32, #tpu.memory_space<vmem>>, %arg11: memref<1x16x256xf32, #tpu.memory_space<vmem>>, %arg12: memref<16x256xf32, #tpu.memory_space<vmem>>) attributes {dimension_semantics = [#tpu.dimension_semantics<parallel>, #tpu.dimension_semantics<arbitrary>], iteration_bounds = array<i64: 2, 2>, scalar_prefetch = 0 : i64, scratch_operands = 1 : i64, tpu.core_type = #tpu.core_type<tc>, window_params = [{transform_indices = @transform_0, window_bounds = array<i64: 1, 16, 256>}, {transform_indices = @transform_1, window_bounds = array<i64: 256, 384>}, {transform_indices = @transform_2, window_bounds = array<i64: 1, 1, 384>}, {pipeline_mode = #tpu.pipeline_mode<synchronous>, transform_indices = @transform_3, window_bounds = array<i64: 16, 128>}, {pipeline_mode = #tpu.pipeline_mode<synchronous>, transform_indices = @transform_4, window_bounds = array<i64: 16, 128>}, {pipeline_mode = #tpu.pipeline_mode<synchronous>, transform_indices = @transform_5, window_bounds = array<i64: 16, 128>}, {pipeline_mode = #tpu.pipeline_mode<synchronous>, transform_indices = @transform_6, window_bounds = array<i64: 16, 128>}, {transform_indices = @transform_7, window_bounds = array<i64: 128, 256>}, {pipeline_mode = #tpu.pipeline_mode<synchronous>, transform_indices = @transform_8, window_bounds = array<i64: 1, 256>}, {transform_indices = @transform_9, window_bounds = array<i64: 1, 16, 256>}]} {
    %c0 = arith.constant 0 : index
    %c0_0 = arith.constant 0 : index
    %c0_1 = arith.constant 0 : index
    %0 = vector.load %arg2[%c0, %c0_0, %c0_1] : memref<1x16x256xf32, #tpu.memory_space<vmem>>, vector<1x16x256xf32>
    %1 = vector.shape_cast %0 : vector<1x16x256xf32> to vector<16x256xf32>
    %c0_2 = arith.constant 0 : index
    %c0_3 = arith.constant 0 : index
    %2 = vector.load %arg3[%c0_2, %c0_3] : memref<256x384xf32, #tpu.memory_space<vmem>>, vector<256x384xf32>
    %c0_4 = arith.constant 0 : index
    %c0_5 = arith.constant 0 : index
    %c0_6 = arith.constant 0 : index
    %3 = vector.load %arg4[%c0_4, %c0_5, %c0_6] : memref<1x1x384xf32, #tpu.memory_space<vmem>>, vector<1x1x384xf32>
    %4 = vector.shape_cast %3 : vector<1x1x384xf32> to vector<384xf32>
    %cst = arith.constant dense<0.000000e+00> : vector<16x384xf32>
    %5 = tpu.matmul %1, %2, %cst {dimension_numbers = #tpu.dot_dimension_numbers<[1], [0], [0], [1], [0, 0, 1, 1], [], []>} : vector<16x256xf32>, vector<256x384xf32>, vector<16x384xf32> -> vector<16x384xf32>
    %6 = vector.shape_cast %4 : vector<384xf32> to vector<1x384xf32>
    %7 = vector.broadcast %6 : vector<1x384xf32> to vector<16x384xf32>
    %8 = arith.addf %5, %7 : vector<16x384xf32>
    %9 = vector.extract_strided_slice %8 {offsets = [0, 0], sizes = [16, 128], strides = [1, 1]} : vector<16x384xf32> to vector<16x128xf32>
    %10 = vector.extract_strided_slice %8 {offsets = [0, 128], sizes = [16, 128], strides = [1, 1]} : vector<16x384xf32> to vector<16x128xf32>
    %11 = vector.extract_strided_slice %8 {offsets = [0, 256], sizes = [16, 128], strides = [1, 1]} : vector<16x384xf32> to vector<16x128xf32>
    %c0_7 = arith.constant 0 : index
    %c0_8 = arith.constant 0 : index
    %12 = vector.load %arg5[%c0_7, %c0_8] : memref<16x128xf32, #tpu.memory_space<vmem>>, vector<16x128xf32>
    %c0_9 = arith.constant 0 : index
    %c0_10 = arith.constant 0 : index
    %13 = vector.load %arg6[%c0_9, %c0_10] : memref<16x128xf32, #tpu.memory_space<vmem>>, vector<16x128xf32>
    %14 = arith.mulf %9, %12 : vector<16x128xf32>
    %c64_i32 = arith.constant 64 : i32
    %15 = tpu.dynamic_rotate %9 by %c64_i32 dim 1 : vector<16x128xf32>, i32 -> vector<16x128xf32>
    %16 = arith.mulf %15, %13 : vector<16x128xf32>
    %17 = arith.addf %14, %16 : vector<16x128xf32>
    %c0_11 = arith.constant 0 : index
    %c0_12 = arith.constant 0 : index
    %18 = vector.load %arg7[%c0_11, %c0_12] : memref<16x128xf32, #tpu.memory_space<vmem>>, vector<16x128xf32>
    %c0_13 = arith.constant 0 : index
    %c0_14 = arith.constant 0 : index
    %19 = vector.load %arg8[%c0_13, %c0_14] : memref<16x128xf32, #tpu.memory_space<vmem>>, vector<16x128xf32>
    %20 = arith.mulf %10, %18 : vector<16x128xf32>
    %c64_i32_15 = arith.constant 64 : i32
    %21 = tpu.dynamic_rotate %10 by %c64_i32_15 dim 1 : vector<16x128xf32>, i32 -> vector<16x128xf32>
    %22 = arith.mulf %21, %19 : vector<16x128xf32>
    %23 = arith.addf %20, %22 : vector<16x128xf32>
    %cst_16 = arith.constant dense<0.000000e+00> : vector<16x16xf32>
    %24 = tpu.matmul %17, %23, %cst_16 {dimension_numbers = #tpu.dot_dimension_numbers<[1], [1], [0], [0], [0, 0, 1, 0], [], []>} : vector<16x128xf32>, vector<16x128xf32>, vector<16x16xf32> -> vector<16x16xf32>
    %cst_17 = arith.constant dense<0xFF800000> : vector<16xf32>
    %25 = vector.multi_reduction <maximumf>, %24, %cst_17 [1] : vector<16x16xf32> to vector<16xf32>
    %26 = vector.shape_cast %25 : vector<16xf32> to vector<16x1xf32>
    %27 = vector.broadcast %26 : vector<16x1xf32> to vector<16x16xf32>
    %28 = arith.subf %24, %27 : vector<16x16xf32>
    %29 = math.exp %28 : vector<16x16xf32>
    %cst_18 = arith.constant dense<0.000000e+00> : vector<16xf32>
    %30 = vector.multi_reduction <add>, %29, %cst_18 [1] : vector<16x16xf32> to vector<16xf32>
    %31 = vector.shape_cast %30 : vector<16xf32> to vector<16x1xf32>
    %32 = tpu.reciprocal %31 {approx = true} : vector<16x1xf32> -> vector<16x1xf32>
    %cst_19 = arith.constant dense<0.000000e+00> : vector<16x128xf32>
    %33 = tpu.matmul %29, %11, %cst_19 {dimension_numbers = #tpu.dot_dimension_numbers<[1], [0], [0], [1], [0, 0, 1, 1], [], []>} : vector<16x16xf32>, vector<16x128xf32>, vector<16x128xf32> -> vector<16x128xf32>
    %34 = vector.broadcast %32 : vector<16x1xf32> to vector<16x128xf32>
    %35 = arith.mulf %33, %34 : vector<16x128xf32>
    %c0_20 = arith.constant 0 : index
    %c0_21 = arith.constant 0 : index
    %36 = vector.load %arg9[%c0_20, %c0_21] : memref<128x256xf32, #tpu.memory_space<vmem>>, vector<128x256xf32>
    %cst_22 = arith.constant dense<0.000000e+00> : vector<16x256xf32>
    %37 = tpu.matmul %35, %36, %cst_22 {dimension_numbers = #tpu.dot_dimension_numbers<[1], [0], [0], [1], [0, 0, 1, 1], [], []>} : vector<16x128xf32>, vector<128x256xf32>, vector<16x256xf32> -> vector<16x256xf32>
    %c0_i32 = arith.constant 0 : i32
    %38 = arith.cmpi eq, %arg1, %c0_i32 : i32
    %39 = arith.extui %38 : i1 to i32
    %c0_i32_23 = arith.constant 0 : i32
    %40 = arith.cmpi ne, %39, %c0_i32_23 : i32
    scf.if %40 {
      %c0_29 = arith.constant 0 : index
      %c0_30 = arith.constant 0 : index
      %47 = vector.load %arg10[%c0_29, %c0_30] : memref<1x256xf32, #tpu.memory_space<vmem>>, vector<1x256xf32>
      %48 = vector.shape_cast %47 : vector<1x256xf32> to vector<256xf32>
      %49 = vector.shape_cast %48 : vector<256xf32> to vector<1x256xf32>
      %50 = vector.shape_cast %49 : vector<1x256xf32> to vector<1x256xf32>
      %51 = vector.broadcast %50 : vector<1x256xf32> to vector<16x256xf32>
      %c0_31 = arith.constant 0 : index
      %c0_32 = arith.constant 0 : index
      %52 = vector.load %arg12[%c0_31, %c0_32] : memref<16x256xf32, #tpu.memory_space<vmem>>, vector<16x256xf32>
      tpu.vector_store %arg12[%c0_31, %c0_32], %51 {strides = array<i32>} : memref<16x256xf32, #tpu.memory_space<vmem>>, vector<16x256xf32>,
    } else {
    }
    %c0_24 = arith.constant 0 : index
    %c0_25 = arith.constant 0 : index
    %41 = vector.load %arg12[%c0_24, %c0_25] : memref<16x256xf32, #tpu.memory_space<vmem>>, vector<16x256xf32>
    %42 = arith.addf %41, %37 : vector<16x256xf32>
    %c0_26 = arith.constant 0 : index
    %c0_27 = arith.constant 0 : index
    %43 = vector.load %arg12[%c0_26, %c0_27] : memref<16x256xf32, #tpu.memory_space<vmem>>, vector<16x256xf32>
    tpu.vector_store %arg12[%c0_26, %c0_27], %42 {strides = array<i32>} : memref<16x256xf32, #tpu.memory_space<vmem>>, vector<16x256xf32>,
    %c1_i32 = arith.constant 1 : i32
    %44 = arith.cmpi eq, %arg1, %c1_i32 : i32
    %45 = arith.extui %44 : i1 to i32
    %c0_i32_28 = arith.constant 0 : i32
    %46 = arith.cmpi ne, %45, %c0_i32_28 : i32
    scf.if %46 {
      %c0_29 = arith.constant 0 : index
      %c0_30 = arith.constant 0 : index
      %47 = vector.load %arg12[%c0_29, %c0_30] : memref<16x256xf32, #tpu.memory_space<vmem>>, vector<16x256xf32>
      %c0_31 = arith.constant 0 : index
      %c0_32 = arith.constant 0 : index
      %c0_33 = arith.constant 0 : index
      %48 = vector.load %arg11[%c0_31, %c0_32, %c0_33] : memref<1x16x256xf32, #tpu.memory_space<vmem>>, vector<1x16x256xf32>
      %49 = vector.shape_cast %48 : vector<1x16x256xf32> to vector<16x256xf32>
      %50 = vector.shape_cast %47 : vector<16x256xf32> to vector<1x16x256xf32>
      tpu.vector_store %arg11[%c0_31, %c0_32, %c0_33], %50 {strides = array<i32>} : memref<1x16x256xf32, #tpu.memory_space<vmem>>, vector<1x16x256xf32>,
    } else {
    }
    return
  }
  func.func @transform_0(%arg0: i32, %arg1: i32) -> (i32, i32, i32) {
    %c0_i32 = arith.constant 0 : i32
    %c0_i32_0 = arith.constant 0 : i32
    %c0_i32_1 = arith.constant 0 : i32
    return %arg0, %c0_i32, %c0_i32_0 : i32, i32, i32
  }
  func.func @transform_1(%arg0: i32, %arg1: i32) -> (i32, i32) {
    %c0_i32 = arith.constant 0 : i32
    %c0_i32_0 = arith.constant 0 : i32
    return %c0_i32, %arg1 : i32, i32
  }
  func.func @transform_2(%arg0: i32, %arg1: i32) -> (i32, i32, i32) {
    %c0_i32 = arith.constant 0 : i32
    %c0_i32_0 = arith.constant 0 : i32
    %c0_i32_1 = arith.constant 0 : i32
    return %arg1, %c0_i32, %c0_i32_0 : i32, i32, i32
  }
  func.func @transform_3(%arg0: i32, %arg1: i32) -> (i32, i32) {
    %c0_i32 = arith.constant 0 : i32
    %c0_i32_0 = arith.constant 0 : i32
    %c0_i32_1 = arith.constant 0 : i32
    return %c0_i32, %c0_i32_0 : i32, i32
  }
  func.func @transform_4(%arg0: i32, %arg1: i32) -> (i32, i32) {
    %c0_i32 = arith.constant 0 : i32
    %c0_i32_0 = arith.constant 0 : i32
    %c0_i32_1 = arith.constant 0 : i32
    return %c0_i32, %c0_i32_0 : i32, i32
  }
  func.func @transform_5(%arg0: i32, %arg1: i32) -> (i32, i32) {
    %c0_i32 = arith.constant 0 : i32
    %c0_i32_0 = arith.constant 0 : i32
    %c0_i32_1 = arith.constant 0 : i32
    return %c0_i32, %c0_i32_0 : i32, i32
  }
  func.func @transform_6(%arg0: i32, %arg1: i32) -> (i32, i32) {
    %c0_i32 = arith.constant 0 : i32
    %c0_i32_0 = arith.constant 0 : i32
    %c0_i32_1 = arith.constant 0 : i32
    return %c0_i32, %c0_i32_0 : i32, i32
  }
  func.func @transform_7(%arg0: i32, %arg1: i32) -> (i32, i32) {
    %c0_i32 = arith.constant 0 : i32
    %c0_i32_0 = arith.constant 0 : i32
    return %arg1, %c0_i32 : i32, i32
  }
  func.func @transform_8(%arg0: i32, %arg1: i32) -> (i32, i32) {
    %c0_i32 = arith.constant 0 : i32
    %c0_i32_0 = arith.constant 0 : i32
    %c0_i32_1 = arith.constant 0 : i32
    return %c0_i32, %c0_i32_0 : i32, i32
  }
  func.func @transform_9(%arg0: i32, %arg1: i32) -> (i32, i32, i32) {
    %c0_i32 = arith.constant 0 : i32
    %c0_i32_0 = arith.constant 0 : i32
    %c0_i32_1 = arith.constant 0 : i32
    return %arg0, %c0_i32, %c0_i32_0 : i32, i32, i32
  }
}

</mosaic_0001>

<llo_original>
// kernel: tpu_custom_call.1
$region0: #{tpu_custom_call.1}
  #allocation0 [shape = 'u32[]', space=smem, size = 0x4, offset = 0x4, fixed_abs, tag = 'smem constant byte address 0x4 - core index']
  #allocation1 [shape = 'u32[144,128]{1,0:T(1,128)}', space=vmem, size = 0x12000, scoped, tag = 'internal scratch']
  #allocation2 [shape = 'f32[16,256]{1,0:T(8,128)}', space=vmem, size = 0x4000, scoped, tag = 'scratch operand']
  %s0 = inlined_call_operand.hbm [shape: f32[2,16,256], index: 0, kind: input, shape index: {}]
  %s1 = inlined_call_operand.hbm [shape: f32[256,768], index: 1, kind: input, shape index: {}]
  %s2 = inlined_call_operand.hbm [shape: f32[2,1,384], index: 2, kind: input, shape index: {}]
  %s3 = inlined_call_operand.hbm [shape: f32[16,128], index: 3, kind: input, shape index: {}]
  %s4 = inlined_call_operand.hbm [shape: f32[16,128], index: 4, kind: input, shape index: {}]
  %s5 = inlined_call_operand.hbm [shape: f32[16,128], index: 5, kind: input, shape index: {}]
  %s6 = inlined_call_operand.hbm [shape: f32[16,128], index: 6, kind: input, shape index: {}]
  %s7 = inlined_call_operand.hbm [shape: f32[256,256], index: 7, kind: input, shape index: {}]
  %s8 = inlined_call_operand.hbm [shape: f32[1,256], index: 8, kind: input, shape index: {}]
  %s9 = inlined_call_operand.hbm [shape: f32[2,16,256], index: 9, kind: output, shape index: {}]
  %s10 = sld [smem:[#allocation0]]
  $region113: #{tpu_custom_call.1} parent=0
    _
  %s12 = ssub.s32 1, %s10
  %s13 = scalar_select 0, %s12, %s10
  $region1: #{tpu_custom_call.1} parent=0
    #allocation3 [shape = 'u8[32768]{0}', space=vmem, size = 0x8000, scoped, tag = 'input window, operand 0']
    #allocation4 [shape = 's32[2]{0}', space=sflag, size = 0x8, scoped, tag = 'scoped memory for tpu_custom_call.1']
    #allocation5 [shape = 's32[2]{0}', space=sflag, size = 0x8, scoped, tag = 'scoped memory for tpu_custom_call.1']
    #allocation6 [shape = 'u8[786432]{0}', space=vmem, size = 0xc0000, scoped, tag = 'input window, operand 1']
    #allocation7 [shape = 's32[2]{0}', space=sflag, size = 0x8, scoped, tag = 'scoped memory for tpu_custom_call.1']
    #allocation8 [shape = 'u8[3072]{0}', space=vmem, size = 0xc00, scoped, tag = 'input window, operand 2']
    #allocation9 [shape = 'u8[8192]{0}', space=vmem, size = 0x2000, scoped, tag = 'input window, operand 3, single buffered']
    #allocation10 [shape = 's32[1]{0}', space=sflag, size = 0x4, scoped, tag = 'scoped memory for tpu_custom_call.1']
    #allocation11 [shape = 'u8[8192]{0}', space=vmem, size = 0x2000, scoped, tag = 'input window, operand 4, single buffered']
    #allocation12 [shape = 'u8[8192]{0}', space=vmem, size = 0x2000, scoped, tag = 'input window, operand 5, single buffered']
    #allocation13 [shape = 's32[1]{0}', space=sflag, size = 0x4, scoped, tag = 'scoped memory for tpu_custom_call.1']
    #allocation14 [shape = 'u8[8192]{0}', space=vmem, size = 0x2000, scoped, tag = 'input window, operand 6, single buffered']
    #allocation15 [shape = 'u8[262144]{0}', space=vmem, size = 0x40000, scoped, tag = 'input window, operand 7']
    #allocation16 [shape = 's32[2]{0}', space=sflag, size = 0x8, scoped, tag = 'scoped memory for tpu_custom_call.1']
    #allocation17 [shape = 'u8[1024]{0}', space=vmem, size = 0x400, scoped, tag = 'input window, operand 8, single buffered']
    #allocation18 [shape = 'u8[32768]{0}', space=vmem, size = 0x8000, scoped, tag = 'output window, operand 0']
    %14 = vsyncpa [#allocation4], 0
    %s15 = scalar_lea.sflag [#allocation4], 1
    %16 = vsyncpa %s15, 0
    %17 = vsyncpa [#allocation7], 0
    %s18 = scalar_lea.sflag [#allocation7], 1
    %19 = vsyncpa %s18, 0
    %20 = vsyncpa [#allocation10], 0
    %21 = vsyncpa [#allocation13], 0
    %22 = vsyncpa [#allocation16], 0
    %s23 = scalar_lea.sflag [#allocation16], 1
    %24 = vsyncpa %s23, 0
    %25 = vsyncpa [#allocation5], 0
    %s26 = scalar_lea.sflag [#allocation5], 1
    %27 = vsyncpa %s26, 0
    loop: start=0, step=1, limit=6
    $region2: #{tpu_custom_call.1} parent=1 // loop_pre_header
      _
    $region3: #{tpu_custom_call.1} parent=1 // loop_header
      %s29 = sphi 0, %s33
      %p30 = scmp.ge.s32.totalorder %s29, 6
      %s36 = sphi 0, %s48
      %s37 = sphi 0, %s44
      %s38 = sphi 0, %s36
      %s39 = sphi 0, %s37
      %s40 = sphi 0, %s38
      %s41 = sphi 0, %s39
      %s51 = sphi 0, %s53
      %s54 = sphi 0, %s51
      %s55 = sphi 0, %s54
      %s71 = sphi 0, %s55
      %s77 = sphi 0, %s79
      %s80 = sphi 0, %s77
      %s81 = sphi 0, %s80
      %s97 = sphi 0, %s81
      %s103 = sphi 0, %s105
      %s106 = sphi 0, %s103
      %s107 = sphi 0, %s106
      %s123 = sphi 0, %s107
      %s127 = sphi 0, %s127
      %s129 = sphi 0, %s127
      %s130 = sphi 0, %s129
      %s144 = sphi 0, %s130
      %s148 = sphi 0, %s148
      %s150 = sphi 0, %s148
      %s151 = sphi 0, %s150
      %s165 = sphi 0, %s151
      %s169 = sphi 0, %s169
      %s171 = sphi 0, %s169
      %s172 = sphi 0, %s171
      %s186 = sphi 0, %s172
      %s190 = sphi 0, %s190
      %s192 = sphi 0, %s190
      %s193 = sphi 0, %s192
      %s207 = sphi 0, %s193
      %s213 = sphi 0, %s215
      %s216 = sphi 0, %s213
      %s217 = sphi 0, %s216
      %s233 = sphi 0, %s217
      %s237 = sphi 0, %s237
      %s239 = sphi 0, %s237
      %s240 = sphi 0, %s239
      %s254 = sphi 0, %s240
      %s260 = sphi 0, %s262
      %s263 = sphi 0, %s260
      %s264 = sphi 0, %s263
      %s280 = sphi 0, %s264
    $region4: #{tpu_custom_call.1} parent=1 // loop_header_branch
      %32 = sbr.rel (%p30) target = $region8
    $region5: #{tpu_custom_call.1} parent=1 // loop_body
      %s34 = ssub.s32 %s29, 1
      %s35 = ssub.s32 %s29, 2
      %s42 = sadd.s32 1, %s37
      %p43 = scmp.ge.s32.totalorder %s42, 2
      %s44 = scalar_select %p43, 0, %s42
      %s45 = sadd.s32 1, %s36
      %s46 = scalar_select %p43, %s45, %s36
      %p47 = scmp.ge.s32.totalorder %s46, 2
      %s48 = scalar_select %p47, 0, %s46
      %s49 = ssub.s32 %s36, %s48
      %p50 = scmp.eq.s32.totalorder %s49, 0
      %s52 = sadd.s32 %s51, 1
      %s53 = scalar_select %p50, %s51, %s52
      %p56 = pneg %p50
      %p57 = scmp.eq.s32.totalorder %s29, 3
      %p58 = por %p56, %p57
      %p59 = scmp.ne.s32.totalorder %s51, %s54
      %p60 = scmp.eq.s32.totalorder %s29, 0
      %p61 = por %p59, %p60
      %p62 = scmp.ne.s32.totalorder %s51, %s54
      %p63 = scmp.eq.s32.totalorder %s34, 3
      %p64 = por %p62, %p63
      %p65 = scmp.ne.s32.totalorder %s54, %s55
      %p66 = scmp.eq.s32.totalorder %s34, 0
      %p67 = por %p65, %p66
      %p68 = scmp.ne.s32.totalorder %s54, %s55
      %p69 = scmp.eq.s32.totalorder %s35, 3
      %p70 = por %p68, %p69
      %p72 = scmp.ne.s32.totalorder %s55, %s71
      %p73 = scmp.eq.s32.totalorder %s35, 0
      %p74 = por %p72, %p73
      %s75 = ssub.s32 %s37, %s44
      %p76 = scmp.eq.s32.totalorder %s75, 0
      %s78 = sadd.s32 %s77, 1
      %s79 = scalar_select %p76, %s77, %s78
      %p82 = pneg %p76
      %p83 = scmp.eq.s32.totalorder %s29, 3
      %p84 = por %p82, %p83
      %p85 = scmp.ne.s32.totalorder %s77, %s80
      %p86 = scmp.eq.s32.totalorder %s29, 0
      %p87 = por %p85, %p86
      %p88 = scmp.ne.s32.totalorder %s77, %s80
      %p89 = scmp.eq.s32.totalorder %s34, 3
      %p90 = por %p88, %p89
      %p91 = scmp.ne.s32.totalorder %s80, %s81
      %p92 = scmp.eq.s32.totalorder %s34, 0
      %p93 = por %p91, %p92
      %p94 = scmp.ne.s32.totalorder %s80, %s81
      %p95 = scmp.eq.s32.totalorder %s35, 3
      %p96 = por %p94, %p95
      %p98 = scmp.ne.s32.totalorder %s81, %s97
      %p99 = scmp.eq.s32.totalorder %s35, 0
      %p100 = por %p98, %p99
      %s101 = ssub.s32 %s37, %s44
      %p102 = scmp.eq.s32.totalorder %s101, 0
      %s104 = sadd.s32 %s103, 1
      %s105 = scalar_select %p102, %s103, %s104
      %p108 = pneg %p102
      %p109 = scmp.eq.s32.totalorder %s29, 3
      %p110 = por %p108, %p109
      %p111 = scmp.ne.s32.totalorder %s103, %s106
      %p112 = scmp.eq.s32.totalorder %s29, 0
      %p113 = por %p111, %p112
      %p114 = scmp.ne.s32.totalorder %s103, %s106
      %p115 = scmp.eq.s32.totalorder %s34, 3
      %p116 = por %p114, %p115
      %p117 = scmp.ne.s32.totalorder %s106, %s107
      %p118 = scmp.eq.s32.totalorder %s34, 0
      %p119 = por %p117, %p118
      %p120 = scmp.ne.s32.totalorder %s106, %s107
      %p121 = scmp.eq.s32.totalorder %s35, 3
      %p122 = por %p120, %p121
      %p124 = scmp.ne.s32.totalorder %s107, %s123
      %p125 = scmp.eq.s32.totalorder %s35, 0
      %p126 = por %p124, %p125
      %s128 = sadd.s32 %s127, 1
      %p131 = scmp.eq.s32.totalorder %s29, 3
      %p132 = scmp.ne.s32.totalorder %s127, %s129
      %p133 = scmp.eq.s32.totalorder %s29, 0
      %p134 = por %p132, %p133
      %p135 = scmp.ne.s32.totalorder %s127, %s129
      %p136 = scmp.eq.s32.totalorder %s34, 3
      %p137 = por %p135, %p136
      %p138 = scmp.ne.s32.totalorder %s129, %s130
      %p139 = scmp.eq.s32.totalorder %s34, 0
      %p140 = por %p138, %p139
      %p141 = scmp.ne.s32.totalorder %s129, %s130
      %p142 = scmp.eq.s32.totalorder %s35, 3
      %p143 = por %p141, %p142
      %p145 = scmp.ne.s32.totalorder %s130, %s144
      %p146 = scmp.eq.s32.totalorder %s35, 0
      %p147 = por %p145, %p146
      %s149 = sadd.s32 %s148, 1
      %p152 = scmp.eq.s32.totalorder %s29, 3
      %p153 = scmp.ne.s32.totalorder %s148, %s150
      %p154 = scmp.eq.s32.totalorder %s29, 0
      %p155 = por %p153, %p154
      %p156 = scmp.ne.s32.totalorder %s148, %s150
      %p157 = scmp.eq.s32.totalorder %s34, 3
      %p158 = por %p156, %p157
      %p159 = scmp.ne.s32.totalorder %s150, %s151
      %p160 = scmp.eq.s32.totalorder %s34, 0
      %p161 = por %p159, %p160
      %p162 = scmp.ne.s32.totalorder %s150, %s151
      %p163 = scmp.eq.s32.totalorder %s35, 3
      %p164 = por %p162, %p163
      %p166 = scmp.ne.s32.totalorder %s151, %s165
      %p167 = scmp.eq.s32.totalorder %s35, 0
      %p168 = por %p166, %p167
      %s170 = sadd.s32 %s169, 1
      %p173 = scmp.eq.s32.totalorder %s29, 3
      %p174 = scmp.ne.s32.totalorder %s169, %s171
      %p175 = scmp.eq.s32.totalorder %s29, 0
      %p176 = por %p174, %p175
      %p177 = scmp.ne.s32.totalorder %s169, %s171
      %p178 = scmp.eq.s32.totalorder %s34, 3
      %p179 = por %p177, %p178
      %p180 = scmp.ne.s32.totalorder %s171, %s172
      %p181 = scmp.eq.s32.totalorder %s34, 0
      %p182 = por %p180, %p181
      %p183 = scmp.ne.s32.totalorder %s171, %s172
      %p184 = scmp.eq.s32.totalorder %s35, 3
      %p185 = por %p183, %p184
      %p187 = scmp.ne.s32.totalorder %s172, %s186
      %p188 = scmp.eq.s32.totalorder %s35, 0
      %p189 = por %p187, %p188
      %s191 = sadd.s32 %s190, 1
      %p194 = scmp.eq.s32.totalorder %s29, 3
      %p195 = scmp.ne.s32.totalorder %s190, %s192
      %p196 = scmp.eq.s32.totalorder %s29, 0
      %p197 = por %p195, %p196
      %p198 = scmp.ne.s32.totalorder %s190, %s192
      %p199 = scmp.eq.s32.totalorder %s34, 3
      %p200 = por %p198, %p199
      %p201 = scmp.ne.s32.totalorder %s192, %s193
      %p202 = scmp.eq.s32.totalorder %s34, 0
      %p203 = por %p201, %p202
      %p204 = scmp.ne.s32.totalorder %s192, %s193
      %p205 = scmp.eq.s32.totalorder %s35, 3
      %p206 = por %p204, %p205
      %p208 = scmp.ne.s32.totalorder %s193, %s207
      %p209 = scmp.eq.s32.totalorder %s35, 0
      %p210 = por %p208, %p209
      %s211 = ssub.s32 %s37, %s44
      %p212 = scmp.eq.s32.totalorder %s211, 0
      %s214 = sadd.s32 %s213, 1
      %s215 = scalar_select %p212, %s213, %s214
      %p218 = pneg %p212
      %p219 = scmp.eq.s32.totalorder %s29, 3
      %p220 = por %p218, %p219
      %p221 = scmp.ne.s32.totalorder %s213, %s216
      %p222 = scmp.eq.s32.totalorder %s29, 0
      %p223 = por %p221, %p222
      %p224 = scmp.ne.s32.totalorder %s213, %s216
      %p225 = scmp.eq.s32.totalorder %s34, 3
      %p226 = por %p224, %p225
      %p227 = scmp.ne.s32.totalorder %s216, %s217
      %p228 = scmp.eq.s32.totalorder %s34, 0
      %p229 = por %p227, %p228
      %p230 = scmp.ne.s32.totalorder %s216, %s217
      %p231 = scmp.eq.s32.totalorder %s35, 3
      %p232 = por %p230, %p231
      %p234 = scmp.ne.s32.totalorder %s217, %s233
      %p235 = scmp.eq.s32.totalorder %s35, 0
      %p236 = por %p234, %p235
      %s238 = sadd.s32 %s237, 1
      %p241 = scmp.eq.s32.totalorder %s29, 3
      %p242 = scmp.ne.s32.totalorder %s237, %s239
      %p243 = scmp.eq.s32.totalorder %s29, 0
      %p244 = por %p242, %p243
      %p245 = scmp.ne.s32.totalorder %s237, %s239
      %p246 = scmp.eq.s32.totalorder %s34, 3
      %p247 = por %p245, %p246
      %p248 = scmp.ne.s32.totalorder %s239, %s240
      %p249 = scmp.eq.s32.totalorder %s34, 0
      %p250 = por %p248, %p249
      %p251 = scmp.ne.s32.totalorder %s239, %s240
      %p252 = scmp.eq.s32.totalorder %s35, 3
      %p253 = por %p251, %p252
      %p255 = scmp.ne.s32.totalorder %s240, %s254
      %p256 = scmp.eq.s32.totalorder %s35, 0
      %p257 = por %p255, %p256
      %s258 = ssub.s32 %s36, %s48
      %p259 = scmp.eq.s32.totalorder %s258, 0
      %s261 = sadd.s32 %s260, 1
      %s262 = scalar_select %p259, %s260, %s261
      %p265 = pneg %p259
      %p266 = scmp.eq.s32.totalorder %s29, 3
      %p267 = por %p265, %p266
      %p268 = scmp.ne.s32.totalorder %s260, %s263
      %p269 = scmp.eq.s32.totalorder %s29, 0
      %p270 = por %p268, %p269
      %p271 = scmp.ne.s32.totalorder %s260, %s263
      %p272 = scmp.eq.s32.totalorder %s34, 3
      %p273 = por %p271, %p272
      %p274 = scmp.ne.s32.totalorder %s263, %s264
      %p275 = scmp.eq.s32.totalorder %s34, 0
      %p276 = por %p274, %p275
      %p277 = scmp.ne.s32.totalorder %s263, %s264
      %p278 = scmp.eq.s32.totalorder %s35, 3
      %p279 = por %p277, %p278
      %p281 = scmp.ne.s32.totalorder %s264, %s280
      %p282 = scmp.eq.s32.totalorder %s35, 0
      %p283 = por %p281, %p282
      %p284 = scmp.le.s32.totalorder 1, %s29
      %p285 = scmp.lt.s32.totalorder %s29, 5
      %p286 = pnand %p284, %p285
      %p287 = pneg %p286
      // Predicated region
      $region9: #{tpu_custom_call.1} parent=5 // pred_check
        _
      $region10: #{tpu_custom_call.1} parent=5 // pred_check_branch
        %289 = sbr.rel (%p286) target = $region12
      $region11: #{tpu_custom_call.1} parent=5 // pred_region
        %s290 = ssub.s32 %s29, 1
        // Predicated region
        $region13: #{tpu_custom_call.1} parent=11 // pred_check
          %p291 = pneg %p140
        $region14: #{tpu_custom_call.1} parent=11 // pred_check_branch
          %293 = sbr.rel (%p291) target = $region16
        $region15: #{tpu_custom_call.1} parent=11 // pred_region
          %s295 = ssub.s32 256, 256
          %296 = vsyncadd [#allocation10], %s295
          %s297 = sshll.u32 [#allocation9], 4
          %s298 = int_to_ptr.vmem [resolvable:$true] %s297
          %303 = dma.hbm_to_vmem [thread:$0]  %s3, 256, %s298, [#allocation10], 128, 128, 8
        $region16: #{tpu_custom_call.1} parent=11 // pred_fallthru
          _
        // Predicated region
        $region17: #{tpu_custom_call.1} parent=11 // pred_check
          %p304 = pneg %p161
        $region18: #{tpu_custom_call.1} parent=11 // pred_check_branch
          %306 = sbr.rel (%p304) target = $region20
        $region19: #{tpu_custom_call.1} parent=11 // pred_region
          %s308 = ssub.s32 256, 256
          %309 = vsyncadd [#allocation10], %s308
          %s310 = sshll.u32 [#allocation11], 4
          %s311 = int_to_ptr.vmem [resolvable:$true] %s310
          %316 = dma.hbm_to_vmem [thread:$0]  %s4, 256, %s311, [#allocation10], 128, 128, 8
        $region20: #{tpu_custom_call.1} parent=11 // pred_fallthru
          _
        // Predicated region
        $region21: #{tpu_custom_call.1} parent=11 // pred_check
          %p317 = pneg %p182
        $region22: #{tpu_custom_call.1} parent=11 // pred_check_branch
          %319 = sbr.rel (%p317) target = $region24
        $region23: #{tpu_custom_call.1} parent=11 // pred_region
          %s321 = ssub.s32 256, 256
          %322 = vsyncadd [#allocation13], %s321
          %s323 = sshll.u32 [#allocation12], 4
          %s324 = int_to_ptr.vmem [resolvable:$true] %s323
          %329 = dma.hbm_to_vmem [thread:$0]  %s5, 256, %s324, [#allocation13], 128, 128, 8
        $region24: #{tpu_custom_call.1} parent=11 // pred_fallthru
          _
        // Predicated region
        $region25: #{tpu_custom_call.1} parent=11 // pred_check
          %p330 = pneg %p203
        $region26: #{tpu_custom_call.1} parent=11 // pred_check_branch
          %332 = sbr.rel (%p330) target = $region28
        $region27: #{tpu_custom_call.1} parent=11 // pred_region
          %s334 = ssub.s32 256, 256
          %335 = vsyncadd [#allocation13], %s334
          %s336 = sshll.u32 [#allocation14], 4
          %s337 = int_to_ptr.vmem [resolvable:$true] %s336
          %342 = dma.hbm_to_vmem [thread:$0]  %s6, 256, %s337, [#allocation13], 128, 128, 8
        $region28: #{tpu_custom_call.1} parent=11 // pred_fallthru
          _
        // Predicated region
        $region29: #{tpu_custom_call.1} parent=11 // pred_check
          %p343 = pneg %p250
        $region30: #{tpu_custom_call.1} parent=11 // pred_check_branch
          %345 = sbr.rel (%p343) target = $region32
        $region31: #{tpu_custom_call.1} parent=11 // pred_region
          %s347 = ssub.s32 32, 32
          %348 = vsyncadd [#allocation16], %s347
          %s350 = sshll.u32 [#allocation17], 4
          %s351 = int_to_ptr.vmem [resolvable:$true] %s350
          %353 = dma.hbm_to_vmem [thread:$0]  %s8, 32, %s351, [#allocation16]
        $region32: #{tpu_custom_call.1} parent=11 // pred_fallthru
          _
      $region12: #{tpu_custom_call.1} parent=5 // pred_fallthru
        _
      %p354 = scmp.lt.s32.totalorder %s29, 4
      // Predicated region
      $region33: #{tpu_custom_call.1} parent=5 // pred_check
        %p355 = pneg %p354
      $region34: #{tpu_custom_call.1} parent=5 // pred_check_branch
        %357 = sbr.rel (%p355) target = $region36
      $region35: #{tpu_custom_call.1} parent=5 // pred_region
        // Predicated region
        $region37: #{tpu_custom_call.1} parent=35 // pred_check
          %p358 = pneg %p61
        $region38: #{tpu_custom_call.1} parent=35 // pred_check_branch
          %360 = sbr.rel (%p358) target = $region40
        $region39: #{tpu_custom_call.1} parent=35 // pred_region
          %s361 = sand.u32 %s51, 1
          %s362 = scalar_lea.sflag [#allocation4], %s361
          %s363 = sand.u32 %s51, 1
          %s364 = smul.addr %s363, 32
          %s365 = scalar_lea.vmem [#allocation3], %s364
          %s367 = ssub.s32 512, 512
          %368 = vsyncadd %s362, %s367
          %s369 = smul.addr %s36, 4
          %s370 = smul.addr %s369, 128
          %s371 = scalar_lea.hbm %s0, %s370
          %s372 = sshll.u32 %s365, 4
          %s373 = int_to_ptr.vmem [resolvable:$true] %s372
          %378 = dma.hbm_to_vmem [thread:$0]  %s371, 512, %s373, %s362, 256, 256, 16
        $region40: #{tpu_custom_call.1} parent=35 // pred_fallthru
          _
        // Predicated region
        $region41: #{tpu_custom_call.1} parent=35 // pred_check
          %p379 = pneg %p87
        $region42: #{tpu_custom_call.1} parent=35 // pred_check_branch
          %381 = sbr.rel (%p379) target = $region44
        $region43: #{tpu_custom_call.1} parent=35 // pred_region
          %s382 = sand.u32 %s29, 1
          %s383 = scalar_lea.sflag [#allocation7], %s382
          %s384 = sand.u32 %s77, 1
          %s385 = smul.addr %s384, 768
          %s386 = scalar_lea.vmem [#allocation6], %s385
          %s387 = smul.u32 3, %s37
          %s389 = ssub.s32 12288, 12288
          %390 = vsyncadd %s383, %s389
          %s391 = smul.addr %s387, 128
          %s392 = scalar_lea.hbm %s1, %s391
          %s393 = sshll.u32 %s386, 4
          %s394 = int_to_ptr.vmem [resolvable:$true] %s393
          %399 = dma.hbm_to_vmem [thread:$0]  %s392, 12288, %s394, %s383, 768, 384, 24
        $region44: #{tpu_custom_call.1} parent=35 // pred_fallthru
          _
        // Predicated region
        $region45: #{tpu_custom_call.1} parent=35 // pred_check
          %p400 = pneg %p113
        $region46: #{tpu_custom_call.1} parent=35 // pred_check_branch
          %402 = sbr.rel (%p400) target = $region48
        $region47: #{tpu_custom_call.1} parent=35 // pred_region
          %s403 = sand.u32 %s29, 1
          %s404 = scalar_lea.sflag [#allocation7], %s403
          %s405 = sand.u32 %s103, 1
          %s406 = smul.addr %s405, 3
          %s407 = scalar_lea.vmem [#allocation8], %s406
          %s409 = ssub.s32 48, 48
          %410 = vsyncadd %s404, %s409
          %s411 = smul.addr %s37, 3
          %s412 = smul.addr %s411, 16
          %s413 = scalar_lea.hbm %s2, %s412
          %s415 = sshll.u32 %s407, 4
          %s416 = int_to_ptr.vmem [resolvable:$true] %s415
          %418 = dma.hbm_to_vmem [thread:$0]  %s413, 48, %s416, %s404
        $region48: #{tpu_custom_call.1} parent=35 // pred_fallthru
          _
        // Predicated region
        $region49: #{tpu_custom_call.1} parent=35 // pred_check
          %p419 = pneg %p223
        $region50: #{tpu_custom_call.1} parent=35 // pred_check_branch
          %421 = sbr.rel (%p419) target = $region52
        $region51: #{tpu_custom_call.1} parent=35 // pred_region
          %s422 = sand.u32 %s29, 1
          %s423 = scalar_lea.sflag [#allocation16], %s422
          %s424 = sand.u32 %s213, 1
          %s425 = smul.addr %s424, 256
          %s426 = scalar_lea.vmem [#allocation15], %s425
          %s427 = smul.u32 16, %s37
          %s429 = ssub.s32 4096, 4096
          %430 = vsyncadd %s423, %s429
          %s431 = smul.addr %s427, 2
          %s432 = smul.addr %s431, 128
          %s433 = scalar_lea.hbm %s7, %s432
          %s434 = sshll.u32 %s426, 4
          %s435 = int_to_ptr.vmem [resolvable:$true] %s434
          %440 = dma.hbm_to_vmem [thread:$0]  %s433, 4096, %s435, %s423, 256, 256, 16
        $region52: #{tpu_custom_call.1} parent=35 // pred_fallthru
          _
      $region36: #{tpu_custom_call.1} parent=5 // pred_fallthru
        _
      %p441 = scmp.le.s32.totalorder 1, %s29
      %p442 = scmp.lt.s32.totalorder %s29, 5
      %p443 = pnand %p441, %p442
      %p444 = pneg %p443
      // Predicated region
      $region53: #{tpu_custom_call.1} parent=5 // pred_check
        _
      $region54: #{tpu_custom_call.1} parent=5 // pred_check_branch
        %446 = sbr.rel (%p443) target = $region56
      $region55: #{tpu_custom_call.1} parent=5 // pred_region
        %s447 = ssub.s32 %s29, 1
        %s448 = sand.u32 %s54, 1
        %s449 = scalar_lea.sflag [#allocation4], %s448
        %s450 = sand.u32 %s54, 1
        %s451 = smul.addr %s450, 32
        %s452 = scalar_lea.vmem [#allocation3], %s451
        // Predicated region
        $region57: #{tpu_custom_call.1} parent=55 // pred_check
          %p453 = pneg %p67
        $region58: #{tpu_custom_call.1} parent=55 // pred_check_branch
          %455 = sbr.rel (%p453) target = $region60
        $region59: #{tpu_custom_call.1} parent=55 // pred_region
          %456 = dma.done %s449, 512
        $region60: #{tpu_custom_call.1} parent=55 // pred_fallthru
          _
        %s457 = sand.u32 %s34, 1
        %s458 = scalar_lea.sflag [#allocation7], %s457
        %s459 = sand.u32 %s80, 1
        %s460 = smul.addr %s459, 768
        %s461 = scalar_lea.vmem [#allocation6], %s460
        // Predicated region
        $region61: #{tpu_custom_call.1} parent=55 // pred_check
          %p462 = pneg %p93
        $region62: #{tpu_custom_call.1} parent=55 // pred_check_branch
          %464 = sbr.rel (%p462) target = $region64
        $region63: #{tpu_custom_call.1} parent=55 // pred_region
          %465 = dma.done %s458, 12288
        $region64: #{tpu_custom_call.1} parent=55 // pred_fallthru
          _
        %s466 = sand.u32 %s34, 1
        %s467 = scalar_lea.sflag [#allocation7], %s466
        %s468 = sand.u32 %s106, 1
        %s469 = smul.addr %s468, 3
        %s470 = scalar_lea.vmem [#allocation8], %s469
        // Predicated region
        $region65: #{tpu_custom_call.1} parent=55 // pred_check
          %p471 = pneg %p119
        $region66: #{tpu_custom_call.1} parent=55 // pred_check_branch
          %473 = sbr.rel (%p471) target = $region68
        $region67: #{tpu_custom_call.1} parent=55 // pred_region
          %474 = dma.done %s467, 48
        $region68: #{tpu_custom_call.1} parent=55 // pred_fallthru
          _
        // Predicated region
        $region69: #{tpu_custom_call.1} parent=55 // pred_check
          %p475 = pneg %p140
        $region70: #{tpu_custom_call.1} parent=55 // pred_check_branch
          %477 = sbr.rel (%p475) target = $region72
        $region71: #{tpu_custom_call.1} parent=55 // pred_region
          %478 = dma.done [#allocation10], 256
        $region72: #{tpu_custom_call.1} parent=55 // pred_fallthru
          _
        // Predicated region
        $region73: #{tpu_custom_call.1} parent=55 // pred_check
          %p479 = pneg %p161
        $region74: #{tpu_custom_call.1} parent=55 // pred_check_branch
          %481 = sbr.rel (%p479) target = $region76
        $region75: #{tpu_custom_call.1} parent=55 // pred_region
          %482 = dma.done [#allocation10], 256
        $region76: #{tpu_custom_call.1} parent=55 // pred_fallthru
          _
        // Predicated region
        $region77: #{tpu_custom_call.1} parent=55 // pred_check
          %p483 = pneg %p182
        $region78: #{tpu_custom_call.1} parent=55 // pred_check_branch
          %485 = sbr.rel (%p483) target = $region80
        $region79: #{tpu_custom_call.1} parent=55 // pred_region
          %486 = dma.done [#allocation13], 256
        $region80: #{tpu_custom_call.1} parent=55 // pred_fallthru
          _
        // Predicated region
        $region81: #{tpu_custom_call.1} parent=55 // pred_check
          %p487 = pneg %p203
        $region82: #{tpu_custom_call.1} parent=55 // pred_check_branch
          %489 = sbr.rel (%p487) target = $region84
        $region83: #{tpu_custom_call.1} parent=55 // pred_region
          %490 = dma.done [#allocation13], 256
        $region84: #{tpu_custom_call.1} parent=55 // pred_fallthru
          _
        %s491 = sand.u32 %s34, 1
        %s492 = scalar_lea.sflag [#allocation16], %s491
        %s493 = sand.u32 %s216, 1
        %s494 = smul.addr %s493, 256
        %s495 = scalar_lea.vmem [#allocation15], %s494
        // Predicated region
        $region85: #{tpu_custom_call.1} parent=55 // pred_check
          %p496 = pneg %p229
        $region86: #{tpu_custom_call.1} parent=55 // pred_check_branch
          %498 = sbr.rel (%p496) target = $region88
        $region87: #{tpu_custom_call.1} parent=55 // pred_region
          %499 = dma.done %s492, 4096
        $region88: #{tpu_custom_call.1} parent=55 // pred_fallthru
          _
        // Predicated region
        $region89: #{tpu_custom_call.1} parent=55 // pred_check
          %p500 = pneg %p250
        $region90: #{tpu_custom_call.1} parent=55 // pred_check_branch
          %502 = sbr.rel (%p500) target = $region92
        $region91: #{tpu_custom_call.1} parent=55 // pred_region
          %503 = dma.done [#allocation16], 32
        $region92: #{tpu_custom_call.1} parent=55 // pred_fallthru
          _
        %s504 = sand.u32 %s54, 1
        %s505 = scalar_lea.sflag [#allocation4], %s504
        %s506 = sand.u32 %s54, 1
        %s507 = smul.addr %s506, 32
        %s508 = scalar_lea.vmem [#allocation3], %s507
        %p509 = pneg %p67
        %p510 = pneg %p64
        %s511 = sand.u32 %s34, 1
        %s512 = scalar_lea.sflag [#allocation7], %s511
        %s513 = sand.u32 %s80, 1
        %s514 = smul.addr %s513, 768
        %s515 = scalar_lea.vmem [#allocation6], %s514
        %p516 = pneg %p93
        %p517 = pneg %p90
        %s518 = sand.u32 %s34, 1
        %s519 = scalar_lea.sflag [#allocation7], %s518
        %s520 = sand.u32 %s106, 1
        %s521 = smul.addr %s520, 3
        %s522 = scalar_lea.vmem [#allocation8], %s521
        %p523 = pneg %p119
        %p524 = pneg %p116
        %p525 = pneg %p140
        %p526 = pneg %p137
        %p527 = pneg %p161
        %p528 = pneg %p158
        %p529 = pneg %p182
        %p530 = pneg %p179
        %p531 = pneg %p203
        %p532 = pneg %p200
        %s533 = sand.u32 %s34, 1
        %s534 = scalar_lea.sflag [#allocation16], %s533
        %s535 = sand.u32 %s216, 1
        %s536 = smul.addr %s535, 256
        %s537 = scalar_lea.vmem [#allocation15], %s536
        %p538 = pneg %p229
        %p539 = pneg %p226
        %p540 = pneg %p250
        %p541 = pneg %p247
        %p542 = pneg %p276
        %p543 = pneg %p273
        %s544 = sand.u32 %s263, 1
        %s545 = scalar_lea.sflag [#allocation5], %s544
        %s546 = sand.u32 %s263, 1
        %s547 = smul.addr %s546, 32
        %s548 = scalar_lea.vmem [#allocation18], %s547
        %s549 = smul.u32 3, %s39
        %s550 = smul.u32 16, %s39
        %v551 = vld [vmem:[%s452] sm:$0xff]
        %v552 = vld [vmem:[%s452 + $0x8] sm:$0xff]
        %v553 = vld [vmem:[%s452 + $0x10] sm:$0xff]
        %v554 = vld [vmem:[%s452 + $0x18] sm:$0xff]
        %v555 = vld [vmem:[%s461] sm:$0xff]
        %v556 = vld [vmem:[%s461 + $0x8] sm:$0xff]
        %v557 = vld [vmem:[%s461 + $0x10] sm:$0xff]
        %v558 = vld [vmem:[%s461 + $0x18] sm:$0xff]
        %v559 = vld [vmem:[%s461 + $0x20] sm:$0xff]
        %v560 = vld [vmem:[%s461 + $0x28] sm:$0xff]
        %v561 = vld [vmem:[%s461 + $0x30] sm:$0xff]
        %v562 = vld [vmem:[%s461 + $0x38] sm:$0xff]
        %v563 = vld [vmem:[%s461 + $0x40] sm:$0xff]
        %v564 = vld [vmem:[%s461 + $0x48] sm:$0xff]
        %v565 = vld [vmem:[%s461 + $0x50] sm:$0xff]
        %v566 = vld [vmem:[%s461 + $0x58] sm:$0xff]
        %v567 = vld [vmem:[%s461 + $0x60] sm:$0xff]
        %v568 = vld [vmem:[%s461 + $0x68] sm:$0xff]
        %v569 = vld [vmem:[%s461 + $0x70] sm:$0xff]
        %v570 = vld [vmem:[%s461 + $0x78] sm:$0xff]
        %v571 = vld [vmem:[%s461 + $0x80] sm:$0xff]
        %v572 = vld [vmem:[%s461 + $0x88] sm:$0xff]
        %v573 = vld [vmem:[%s461 + $0x90] sm:$0xff]
        %v574 = vld [vmem:[%s461 + $0x98] sm:$0xff]
        %v575 = vld [vmem:[%s461 + $0xa0] sm:$0xff]
        %v576 = vld [vmem:[%s461 + $0xa8] sm:$0xff]
        %v577 = vld [vmem:[%s461 + $0xb0] sm:$0xff]
        %v578 = vld [vmem:[%s461 + $0xb8] sm:$0xff]
        %v579 = vld [vmem:[%s461 + $0xc0] sm:$0xff]
        %v580 = vld [vmem:[%s461 + $0xc8] sm:$0xff]
        %v581 = vld [vmem:[%s461 + $0xd0] sm:$0xff]
        %v582 = vld [vmem:[%s461 + $0xd8] sm:$0xff]
        %v583 = vld [vmem:[%s461 + $0xe0] sm:$0xff]
        %v584 = vld [vmem:[%s461 + $0xe8] sm:$0xff]
        %v585 = vld [vmem:[%s461 + $0xf0] sm:$0xff]
        %v586 = vld [vmem:[%s461 + $0xf8] sm:$0xff]
        %v587 = vld [vmem:[%s461 + $0x100] sm:$0xff]
        %v588 = vld [vmem:[%s461 + $0x108] sm:$0xff]
        %v589 = vld [vmem:[%s461 + $0x110] sm:$0xff]
        %v590 = vld [vmem:[%s461 + $0x118] sm:$0xff]
        %v591 = vld [vmem:[%s461 + $0x120] sm:$0xff]
        %v592 = vld [vmem:[%s461 + $0x128] sm:$0xff]
        %v593 = vld [vmem:[%s461 + $0x130] sm:$0xff]
        %v594 = vld [vmem:[%s461 + $0x138] sm:$0xff]
        %v595 = vld [vmem:[%s461 + $0x140] sm:$0xff]
        %v596 = vld [vmem:[%s461 + $0x148] sm:$0xff]
        %v597 = vld [vmem:[%s461 + $0x150] sm:$0xff]
        %v598 = vld [vmem:[%s461 + $0x158] sm:$0xff]
        %v599 = vld [vmem:[%s461 + $0x160] sm:$0xff]
        %v600 = vld [vmem:[%s461 + $0x168] sm:$0xff]
        %v601 = vld [vmem:[%s461 + $0x170] sm:$0xff]
        %v602 = vld [vmem:[%s461 + $0x178] sm:$0xff]
        %v603 = vld [vmem:[%s461 + $0x180] sm:$0xff]
        %v604 = vld [vmem:[%s461 + $0x188] sm:$0xff]
        %v605 = vld [vmem:[%s461 + $0x190] sm:$0xff]
        %v606 = vld [vmem:[%s461 + $0x198] sm:$0xff]
        %v607 = vld [vmem:[%s461 + $0x1a0] sm:$0xff]
        %v608 = vld [vmem:[%s461 + $0x1a8] sm:$0xff]
        %v609 = vld [vmem:[%s461 + $0x1b0] sm:$0xff]
        %v610 = vld [vmem:[%s461 + $0x1b8] sm:$0xff]
        %v611 = vld [vmem:[%s461 + $0x1c0] sm:$0xff]
        %v612 = vld [vmem:[%s461 + $0x1c8] sm:$0xff]
        %v613 = vld [vmem:[%s461 + $0x1d0] sm:$0xff]
        %v614 = vld [vmem:[%s461 + $0x1d8] sm:$0xff]
        %v615 = vld [vmem:[%s461 + $0x1e0] sm:$0xff]
        %v616 = vld [vmem:[%s461 + $0x1e8] sm:$0xff]
        %v617 = vld [vmem:[%s461 + $0x1f0] sm:$0xff]
        %v618 = vld [vmem:[%s461 + $0x1f8] sm:$0xff]
        %v619 = vld [vmem:[%s461 + $0x200] sm:$0xff]
        %v620 = vld [vmem:[%s461 + $0x208] sm:$0xff]
        %v621 = vld [vmem:[%s461 + $0x210] sm:$0xff]
        %v622 = vld [vmem:[%s461 + $0x218] sm:$0xff]
        %v623 = vld [vmem:[%s461 + $0x220] sm:$0xff]
        %v624 = vld [vmem:[%s461 + $0x228] sm:$0xff]
        %v625 = vld [vmem:[%s461 + $0x230] sm:$0xff]
        %v626 = vld [vmem:[%s461 + $0x238] sm:$0xff]
        %v627 = vld [vmem:[%s461 + $0x240] sm:$0xff]
        %v628 = vld [vmem:[%s461 + $0x248] sm:$0xff]
        %v629 = vld [vmem:[%s461 + $0x250] sm:$0xff]
        %v630 = vld [vmem:[%s461 + $0x258] sm:$0xff]
        %v631 = vld [vmem:[%s461 + $0x260] sm:$0xff]
        %v632 = vld [vmem:[%s461 + $0x268] sm:$0xff]
        %v633 = vld [vmem:[%s461 + $0x270] sm:$0xff]
        %v634 = vld [vmem:[%s461 + $0x278] sm:$0xff]
        %v635 = vld [vmem:[%s461 + $0x280] sm:$0xff]
        %v636 = vld [vmem:[%s461 + $0x288] sm:$0xff]
        %v637 = vld [vmem:[%s461 + $0x290] sm:$0xff]
        %v638 = vld [vmem:[%s461 + $0x298] sm:$0xff]
        %v639 = vld [vmem:[%s461 + $0x2a0] sm:$0xff]
        %v640 = vld [vmem:[%s461 + $0x2a8] sm:$0xff]
        %v641 = vld [vmem:[%s461 + $0x2b0] sm:$0xff]
        %v642 = vld [vmem:[%s461 + $0x2b8] sm:$0xff]
        %v643 = vld [vmem:[%s461 + $0x2c0] sm:$0xff]
        %v644 = vld [vmem:[%s461 + $0x2c8] sm:$0xff]
        %v645 = vld [vmem:[%s461 + $0x2d0] sm:$0xff]
        %v646 = vld [vmem:[%s461 + $0x2d8] sm:$0xff]
        %v647 = vld [vmem:[%s461 + $0x2e0] sm:$0xff]
        %v648 = vld [vmem:[%s461 + $0x2e8] sm:$0xff]
        %v649 = vld [vmem:[%s461 + $0x2f0] sm:$0xff]
        %v650 = vld [vmem:[%s461 + $0x2f8] sm:$0xff]
        %v651 = vld [vmem:[%s470] sm:$0x7]
        %v653 = vlaneseq
        %v654 = vshrl.u32 %v653, 7
        %v655 = vsub.s32 0, %v654
        %v656 = vrot.slane %v651, %v655
        %v657 = vlaneseq
        %v658 = vshrl.u32 %v657, 7
        %v659 = vsub.s32 1, %v658
        %v660 = vrot.slane %v651, %v659
        %v661 = vlaneseq
        %v662 = vshrl.u32 %v661, 7
        %v663 = vsub.s32 2, %v662
        %v664 = vrot.slane %v651, %v663
        %668 = vmatprep.subr.mxu0 %v556
        %669 = vmatpush1.msra.mxu0 %v555
        %670 = vmatprep.subr.mxu0 %v559
        %671 = vmatpush1.msra.mxu0 %v558
        %672 = vmatprep.subr.mxu0 %v562
        %673 = vmatpush1.msra.mxu0 %v561
        %674 = vmatprep.subr.mxu0 %v565
        %675 = vmatpush1.msra.mxu0 %v564
        %676 = vmatprep.subr.mxu0 %v568
        %677 = vmatpush1.msra.mxu0 %v567
        %678 = vmatprep.subr.mxu0 %v571
        %679 = vmatpush1.msra.mxu0 %v570
        %680 = vmatprep.subr.mxu0 %v574
        %681 = vmatpush1.msra.mxu0 %v573
        %682 = vmatprep.subr.mxu0 %v577
        %683 = vmatpush1.msra.mxu0 %v576
        %684 = vmatprep.subr.mxu0 %v580
        %685 = vmatpush1.msra.mxu0 %v579
        %686 = vmatprep.subr.mxu0 %v583
        %687 = vmatpush1.msra.mxu0 %v582
        %688 = vmatprep.subr.mxu0 %v586
        %689 = vmatpush1.msra.mxu0 %v585
        %690 = vmatprep.subr.mxu0 %v589
        %691 = vmatpush1.msra.mxu0 %v588
        %692 = vmatprep.subr.mxu0 %v592
        %693 = vmatpush1.msra.mxu0 %v591
        %694 = vmatprep.subr.mxu0 %v595
        %695 = vmatpush1.msra.mxu0 %v594
        %696 = vmatprep.subr.mxu0 %v598
        %697 = vmatpush1.msra.mxu0 %v597
        %698 = vmatprep.subr.mxu0 %v601
        %699 = vmatpush1.msra.mxu0 %v600
        %700 = vmatprep.subr.mxu0 %v604
        %701 = vmatpush1.msra.mxu0 %v603
        %702 = vmatprep.subr.mxu0 %v607
        %703 = vmatpush1.msra.mxu0 %v606
        %704 = vmatprep.subr.mxu0 %v610
        %705 = vmatpush1.msra.mxu0 %v609
        %706 = vmatprep.subr.mxu0 %v613
        %707 = vmatpush1.msra.mxu0 %v612
        %708 = vmatprep.subr.mxu0 %v616
        %709 = vmatpush1.msra.mxu0 %v615
        %710 = vmatprep.subr.mxu0 %v619
        %711 = vmatpush1.msra.mxu0 %v618
        %712 = vmatprep.subr.mxu0 %v622
        %713 = vmatpush1.msra.mxu0 %v621
        %714 = vmatprep.subr.mxu0 %v625
        %715 = vmatpush1.msra.mxu0 %v624
        %716 = vmatprep.subr.mxu0 %v628
        %717 = vmatpush1.msra.mxu0 %v627
        %718 = vmatprep.subr.mxu0 %v631
        %719 = vmatpush1.msra.mxu0 %v630
        %720 = vmatprep.subr.mxu0 %v634
        %721 = vmatpush1.msra.mxu0 %v633
        %722 = vmatprep.subr.mxu0 %v637
        %723 = vmatpush1.msra.mxu0 %v636
        %724 = vmatprep.subr.mxu0 %v640
        %725 = vmatpush1.msra.mxu0 %v639
        %726 = vmatprep.subr.mxu0 %v643
        %727 = vmatpush1.msra.mxu0 %v642
        %728 = vmatprep.subr.mxu0 %v646
        %729 = vmatpush1.msra.mxu0 %v645
        %730 = vmatprep.subr.mxu0 %v649
        %731 = vmatpush1.msra.mxu0 %v648
        %732 = vmatprep.mubr.f32.mxu0 %v552
        %733 = vmatmul.mubr.f32.gmra.mrb[0].mxu0 %v551
        %v734 = vpop.f32.mrb[0].mxu0
        %v735 = vadd.f32 %v656, %v734
        %v736 = vpop.f32.mrb[0].mxu0
        %v737 = vadd.f32 %v660, %v736
        %738 = vmatprep.mubr.f32.mxu0 %v554
        %739 = vmatmul.mubr.f32.gmra.mrb[0].mxu0 %v553
        %v740 = vpop.f32.mrb[0].mxu0
        %v741 = vadd.f32 %v656, %v740
        %v742 = vpop.f32.mrb[0].mxu0
        %v743 = vadd.f32 %v660, %v742
        %744 = vdwg.mxu0
        %745 = vmatprep.subr.mxu0 0.0
        %746 = vmatpush1.msra.mxu0 %v557
        %747 = vmatprep.subr.mxu0 0.0
        %748 = vmatpush1.msra.mxu0 %v560
        %749 = vmatprep.subr.mxu0 0.0
        %750 = vmatpush1.msra.mxu0 %v563
        %751 = vmatprep.subr.mxu0 0.0
        %752 = vmatpush1.msra.mxu0 %v566
        %753 = vmatprep.subr.mxu0 0.0
        %754 = vmatpush1.msra.mxu0 %v569
        %755 = vmatprep.subr.mxu0 0.0
        %756 = vmatpush1.msra.mxu0 %v572
        %757 = vmatprep.subr.mxu0 0.0
        %758 = vmatpush1.msra.mxu0 %v575
        %759 = vmatprep.subr.mxu0 0.0
        %760 = vmatpush1.msra.mxu0 %v578
        %761 = vmatprep.subr.mxu0 0.0
        %762 = vmatpush1.msra.mxu0 %v581
        %763 = vmatprep.subr.mxu0 0.0
        %764 = vmatpush1.msra.mxu0 %v584
        %765 = vmatprep.subr.mxu0 0.0
        %766 = vmatpush1.msra.mxu0 %v587
        %767 = vmatprep.subr.mxu0 0.0
        %768 = vmatpush1.msra.mxu0 %v590
        %769 = vmatprep.subr.mxu0 0.0
        %770 = vmatpush1.msra.mxu0 %v593
        %771 = vmatprep.subr.mxu0 0.0
        %772 = vmatpush1.msra.mxu0 %v596
        %773 = vmatprep.subr.mxu0 0.0
        %774 = vmatpush1.msra.mxu0 %v599
        %775 = vmatprep.subr.mxu0 0.0
        %776 = vmatpush1.msra.mxu0 %v602
        %777 = vmatprep.subr.mxu0 0.0
        %778 = vmatpush1.msra.mxu0 %v605
        %779 = vmatprep.subr.mxu0 0.0
        %780 = vmatpush1.msra.mxu0 %v608
        %781 = vmatprep.subr.mxu0 0.0
        %782 = vmatpush1.msra.mxu0 %v611
        %783 = vmatprep.subr.mxu0 0.0
        %784 = vmatpush1.msra.mxu0 %v614
        %785 = vmatprep.subr.mxu0 0.0
        %786 = vmatpush1.msra.mxu0 %v617
        %787 = vmatprep.subr.mxu0 0.0
        %788 = vmatpush1.msra.mxu0 %v620
        %789 = vmatprep.subr.mxu0 0.0
        %790 = vmatpush1.msra.mxu0 %v623
        %791 = vmatprep.subr.mxu0 0.0
        %792 = vmatpush1.msra.mxu0 %v626
        %793 = vmatprep.subr.mxu0 0.0
        %794 = vmatpush1.msra.mxu0 %v629
        %795 = vmatprep.subr.mxu0 0.0
        %796 = vmatpush1.msra.mxu0 %v632
        %797 = vmatprep.subr.mxu0 0.0
        %798 = vmatpush1.msra.mxu0 %v635
        %799 = vmatprep.subr.mxu0 0.0
        %800 = vmatpush1.msra.mxu0 %v638
        %801 = vmatprep.subr.mxu0 0.0
        %802 = vmatpush1.msra.mxu0 %v641
        %803 = vmatprep.subr.mxu0 0.0
        %804 = vmatpush1.msra.mxu0 %v644
        %805 = vmatprep.subr.mxu0 0.0
        %806 = vmatpush1.msra.mxu0 %v647
        %807 = vmatprep.subr.mxu0 0.0
        %808 = vmatpush1.msra.mxu0 %v650
        %809 = vmatprep.mubr.f32.mxu0 %v552
        %810 = vmatmul.mubr.f32.gmra.mrb[0].mxu0 %v551
        %v811 = vpop.f32.mrb[0].mxu0
        %v812 = vadd.f32 %v664, %v811
        %v813 = vpop.f32.mrb[0].mxu0
        %814 = vmatprep.mubr.f32.mxu0 %v554
        %815 = vmatmul.mubr.f32.gmra.mrb[0].mxu0 %v553
        %v816 = vpop.f32.mrb[0].mxu0
        %v817 = vadd.f32 %v664, %v816
        %v818 = vpop.f32.mrb[0].mxu0
        %819 = vdwg.mxu0
        %v820 = vld [vmem:[#allocation9] sm:$0xff]
        %v821 = vld [vmem:[#allocation9 + $0x8] sm:$0xff]
        %v822 = vld [vmem:[#allocation11] sm:$0xff]
        %v823 = vld [vmem:[#allocation11 + $0x8] sm:$0xff]
        %v824 = vmul.f32 %v735, %v820
        %v825 = vmul.f32 %v741, %v821
        %826 = vrot.lane.b32.xlu0 %v735, 64
        %v827 = vpop.permute.xlu0 %826
        %828 = vrot.lane.b32.xlu0 %v741, 64
        %v829 = vpop.permute.xlu0 %828
        %v830 = vmul.f32 %v827, %v822
        %v831 = vmul.f32 %v829, %v823
        %v832 = vadd.f32 %v824, %v830
        %v833 = vadd.f32 %v825, %v831
        %v834 = vld [vmem:[#allocation12] sm:$0xff]
        %v835 = vld [vmem:[#allocation12 + $0x8] sm:$0xff]
        %v836 = vld [vmem:[#allocation14] sm:$0xff]
        %v837 = vld [vmem:[#allocation14 + $0x8] sm:$0xff]
        %v838 = vmul.f32 %v737, %v834
        %v839 = vmul.f32 %v743, %v835
        %840 = vrot.lane.b32.xlu0 %v737, 64
        %v841 = vpop.permute.xlu0 %840
        %842 = vrot.lane.b32.xlu0 %v743, 64
        %v843 = vpop.permute.xlu0 %842
        %v844 = vmul.f32 %v841, %v836
        %v845 = vmul.f32 %v843, %v837
        %v846 = vadd.f32 %v838, %v844
        %v847 = vadd.f32 %v839, %v845
        %848 = vmatprep.subr.mxu0 0.0
        %849 = vmatpush1.xpose.msra.mxu0 %v846
        %850 = vmatprep.subr.mxu0 0.0
        %851 = vmatpush1.xpose.msra.mxu0 %v847
        %852 = vmatprep.subr.mxu0 0.0
        %853 = vmatpush1.xpose.msra.mxu0 0.0
        %854 = vmatprep.subr.mxu0 0.0
        %855 = vmatpush1.xpose.msra.mxu0 0.0
        %856 = vmatprep.subr.mxu0 0.0
        %857 = vmatpush1.xpose.msra.mxu0 0.0
        %858 = vmatprep.subr.mxu0 0.0
        %859 = vmatpush1.xpose.msra.mxu0 0.0
        %860 = vmatprep.subr.mxu0 0.0
        %861 = vmatpush1.xpose.msra.mxu0 0.0
        %862 = vmatprep.subr.mxu0 0.0
        %863 = vmatpush1.xpose.msra.mxu0 0.0
        %864 = vmatprep.subr.mxu0 0.0
        %865 = vmatpush1.xpose.msra.mxu0 0.0
        %866 = vmatprep.subr.mxu0 0.0
        %867 = vmatpush1.xpose.msra.mxu0 0.0
        %868 = vmatprep.subr.mxu0 0.0
        %869 = vmatpush1.xpose.msra.mxu0 0.0
        %870 = vmatprep.subr.mxu0 0.0
        %871 = vmatpush1.xpose.msra.mxu0 0.0
        %872 = vmatprep.subr.mxu0 0.0
        %873 = vmatpush1.xpose.msra.mxu0 0.0
        %874 = vmatprep.subr.mxu0 0.0
        %875 = vmatpush1.xpose.msra.mxu0 0.0
        %876 = vmatprep.subr.mxu0 0.0
        %877 = vmatpush1.xpose.msra.mxu0 0.0
        %878 = vmatprep.subr.mxu0 0.0
        %879 = vmatpush1.xpose.msra.mxu0 0.0
        %880 = vmatprep.subr.mxu0 0.0
        %881 = vmatpush1.xpose.msra.mxu0 0.0
        %882 = vmatprep.subr.mxu0 0.0
        %883 = vmatpush1.xpose.msra.mxu0 0.0
        %884 = vmatprep.subr.mxu0 0.0
        %885 = vmatpush1.xpose.msra.mxu0 0.0
        %886 = vmatprep.subr.mxu0 0.0
        %887 = vmatpush1.xpose.msra.mxu0 0.0
        %888 = vmatprep.subr.mxu0 0.0
        %889 = vmatpush1.xpose.msra.mxu0 0.0
        %890 = vmatprep.subr.mxu0 0.0
        %891 = vmatpush1.xpose.msra.mxu0 0.0
        %892 = vmatprep.subr.mxu0 0.0
        %893 = vmatpush1.xpose.msra.mxu0 0.0
        %894 = vmatprep.subr.mxu0 0.0
        %895 = vmatpush1.xpose.msra.mxu0 0.0
        %896 = vmatprep.subr.mxu0 0.0
        %897 = vmatpush1.xpose.msra.mxu0 0.0
        %898 = vmatprep.subr.mxu0 0.0
        %899 = vmatpush1.xpose.msra.mxu0 0.0
        %900 = vmatprep.subr.mxu0 0.0
        %901 = vmatpush1.xpose.msra.mxu0 0.0
        %902 = vmatprep.subr.mxu0 0.0
        %903 = vmatpush1.xpose.msra.mxu0 0.0
        %904 = vmatprep.subr.mxu0 0.0
        %905 = vmatpush1.xpose.msra.mxu0 0.0
        %906 = vmatprep.subr.mxu0 0.0
        %907 = vmatpush1.xpose.msra.mxu0 0.0
        %908 = vmatprep.subr.mxu0 0.0
        %909 = vmatpush1.xpose.msra.mxu0 0.0
        %910 = vmatprep.subr.mxu0 0.0
        %911 = vmatpush1.xpose.msra.mxu0 0.0
        %912 = vmatprep.mubr.f32.mxu0 0.0
        %913 = vmatmul.mubr.f32.gmra.mrb[0].mxu0 %v832
        %v914 = vpop.f32.mrb[0].mxu0
        %v915 = vadd.f32 0.0, %v914
        %v916 = vpop.f32.mrb[0].mxu0
        %917 = vmatprep.mubr.f32.mxu0 0.0
        %918 = vmatmul.mubr.f32.gmra.mrb[0].mxu0 %v833
        %v919 = vpop.f32.mrb[0].mxu0
        %v920 = vadd.f32 0.0, %v919
        %v921 = vpop.f32.mrb[0].mxu0
        %922 = vdwg.mxu0
        %vm923 = vcmask 130048
        %v924 = vsel %vm923, %v915, -inf
        %925 = vmax.xlane.f32.xlu0 %v924
        %v926 = vpop.xlane.xlu0 %925
        %v927 = vsel %vm923, %v920, -inf
        %928 = vmax.xlane.f32.xlu0 %v927
        %v929 = vpop.xlane.xlu0 %928
        %v930 = vsub.f32 %v915, %v926
        %v931 = vsub.f32 %v920, %v929
        %v932 = vmul.f32 %v930, 1.442695
        %v933 = vpow.pop %v932
        %v934 = vmul.f32 %v931, 1.442695
        %v935 = vpow.pop %v934
        %v936 = vsel %vm923, %v933, 0.0
        %937 = vadd.xlane.f32.xlu0 %v936
        %v938 = vpop.xlane.xlu0 %937
        %v939 = vsel %vm923, %v935, 0.0
        %940 = vadd.xlane.f32.xlu0 %v939
        %v941 = vpop.xlane.xlu0 %940
        %v942 = vrcp.pop %v938
        %v943 = vrcp.pop %v941
        %v945 = vsel %vm923, %v933, 0
        %v948 = vsel %vm923, %v935, 0
        %950 = vmatprep.subr.mxu0 0.0
        %951 = vmatpush1.msra.mxu0 %v812
        %952 = vmatprep.subr.mxu0 0.0
        %953 = vmatpush1.msra.mxu0 %v817
        %954 = vmatprep.subr.mxu0 0.0
        %955 = vmatpush1.msra.mxu0 0.0
        %956 = vmatprep.subr.mxu0 0.0
        %957 = vmatpush1.msra.mxu0 0.0
        %958 = vmatprep.subr.mxu0 0.0
        %959 = vmatpush1.msra.mxu0 0.0
        %960 = vmatprep.subr.mxu0 0.0
        %961 = vmatpush1.msra.mxu0 0.0
        %962 = vmatprep.subr.mxu0 0.0
        %963 = vmatpush1.msra.mxu0 0.0
        %964 = vmatprep.subr.mxu0 0.0
        %965 = vmatpush1.msra.mxu0 0.0
        %966 = vmatprep.subr.mxu0 0.0
        %967 = vmatpush1.msra.mxu0 0.0
        %968 = vmatprep.subr.mxu0 0.0
        %969 = vmatpush1.msra.mxu0 0.0
        %970 = vmatprep.subr.mxu0 0.0
        %971 = vmatpush1.msra.mxu0 0.0
        %972 = vmatprep.subr.mxu0 0.0
        %973 = vmatpush1.msra.mxu0 0.0
        %974 = vmatprep.subr.mxu0 0.0
        %975 = vmatpush1.msra.mxu0 0.0
        %976 = vmatprep.subr.mxu0 0.0
        %977 = vmatpush1.msra.mxu0 0.0
        %978 = vmatprep.subr.mxu0 0.0
        %979 = vmatpush1.msra.mxu0 0.0
        %980 = vmatprep.subr.mxu0 0.0
        %981 = vmatpush1.msra.mxu0 0.0
        %982 = vmatprep.subr.mxu0 0.0
        %983 = vmatpush1.msra.mxu0 0.0
        %984 = vmatprep.subr.mxu0 0.0
        %985 = vmatpush1.msra.mxu0 0.0
        %986 = vmatprep.subr.mxu0 0.0
        %987 = vmatpush1.msra.mxu0 0.0
        %988 = vmatprep.subr.mxu0 0.0
        %989 = vmatpush1.msra.mxu0 0.0
        %990 = vmatprep.subr.mxu0 0.0
        %991 = vmatpush1.msra.mxu0 0.0
        %992 = vmatprep.subr.mxu0 0.0
        %993 = vmatpush1.msra.mxu0 0.0
        %994 = vmatprep.subr.mxu0 0.0
        %995 = vmatpush1.msra.mxu0 0.0
        %996 = vmatprep.subr.mxu0 0.0
        %997 = vmatpush1.msra.mxu0 0.0
        %998 = vmatprep.subr.mxu0 0.0
        %999 = vmatpush1.msra.mxu0 0.0
        %1000 = vmatprep.subr.mxu0 0.0
        %1001 = vmatpush1.msra.mxu0 0.0
        %1002 = vmatprep.subr.mxu0 0.0
        %1003 = vmatpush1.msra.mxu0 0.0
        %1004 = vmatprep.subr.mxu0 0.0
        %1005 = vmatpush1.msra.mxu0 0.0
        %1006 = vmatprep.subr.mxu0 0.0
        %1007 = vmatpush1.msra.mxu0 0.0
        %1008 = vmatprep.subr.mxu0 0.0
        %1009 = vmatpush1.msra.mxu0 0.0
        %1010 = vmatprep.subr.mxu0 0.0
        %1011 = vmatpush1.msra.mxu0 0.0
        %1012 = vmatprep.subr.mxu0 0.0
        %1013 = vmatpush1.msra.mxu0 0.0
        %1014 = vmatprep.mubr.f32.mxu0 0.0
        %1015 = vmatmul.mubr.f32.gmra.mrb[0].mxu0 %v945
        %v1016 = vpop.f32.mrb[0].mxu0
        %v1017 = vadd.f32 0.0, %v1016
        %v1018 = vpop.f32.mrb[0].mxu0
        %1019 = vmatprep.mubr.f32.mxu0 0.0
        %1020 = vmatmul.mubr.f32.gmra.mrb[0].mxu0 %v948
        %v1021 = vpop.f32.mrb[0].mxu0
        %v1022 = vadd.f32 0.0, %v1021
        %v1023 = vpop.f32.mrb[0].mxu0
        %1024 = vdwg.mxu0
        %v1025 = vmul.f32 %v1017, %v942
        %v1026 = vmul.f32 %v1022, %v943
        %v1027 = vld [vmem:[%s495] sm:$0xff]
        %v1028 = vld [vmem:[%s495 + $0x8] sm:$0xff]
        %v1029 = vld [vmem:[%s495 + $0x10] sm:$0xff]
        %v1030 = vld [vmem:[%s495 + $0x18] sm:$0xff]
        %v1031 = vld [vmem:[%s495 + $0x20] sm:$0xff]
        %v1032 = vld [vmem:[%s495 + $0x28] sm:$0xff]
        %v1033 = vld [vmem:[%s495 + $0x30] sm:$0xff]
        %v1034 = vld [vmem:[%s495 + $0x38] sm:$0xff]
        %v1035 = vld [vmem:[%s495 + $0x40] sm:$0xff]
        %v1036 = vld [vmem:[%s495 + $0x48] sm:$0xff]
        %v1037 = vld [vmem:[%s495 + $0x50] sm:$0xff]
        %v1038 = vld [vmem:[%s495 + $0x58] sm:$0xff]
        %v1039 = vld [vmem:[%s495 + $0x60] sm:$0xff]
        %v1040 = vld [vmem:[%s495 + $0x68] sm:$0xff]
        %v1041 = vld [vmem:[%s495 + $0x70] sm:$0xff]
        %v1042 = vld [vmem:[%s495 + $0x78] sm:$0xff]
        %v1043 = vld [vmem:[%s495 + $0x80] sm:$0xff]
        %v1044 = vld [vmem:[%s495 + $0x88] sm:$0xff]
        %v1045 = vld [vmem:[%s495 + $0x90] sm:$0xff]
        %v1046 = vld [vmem:[%s495 + $0x98] sm:$0xff]
        %v1047 = vld [vmem:[%s495 + $0xa0] sm:$0xff]
        %v1048 = vld [vmem:[%s495 + $0xa8] sm:$0xff]
        %v1049 = vld [vmem:[%s495 + $0xb0] sm:$0xff]
        %v1050 = vld [vmem:[%s495 + $0xb8] sm:$0xff]
        %v1051 = vld [vmem:[%s495 + $0xc0] sm:$0xff]
        %v1052 = vld [vmem:[%s495 + $0xc8] sm:$0xff]
        %v1053 = vld [vmem:[%s495 + $0xd0] sm:$0xff]
        %v1054 = vld [vmem:[%s495 + $0xd8] sm:$0xff]
        %v1055 = vld [vmem:[%s495 + $0xe0] sm:$0xff]
        %v1056 = vld [vmem:[%s495 + $0xe8] sm:$0xff]
        %v1057 = vld [vmem:[%s495 + $0xf0] sm:$0xff]
        %v1058 = vld [vmem:[%s495 + $0xf8] sm:$0xff]
        %1059 = vmatprep.subr.mxu0 %v1028
        %1060 = vmatpush1.msra.mxu0 %v1027
        %1061 = vmatprep.subr.mxu0 %v1030
        %1062 = vmatpush1.msra.mxu0 %v1029
        %1063 = vmatprep.subr.mxu0 %v1032
        %1064 = vmatpush1.msra.mxu0 %v1031
        %1065 = vmatprep.subr.mxu0 %v1034
        %1066 = vmatpush1.msra.mxu0 %v1033
        %1067 = vmatprep.subr.mxu0 %v1036
        %1068 = vmatpush1.msra.mxu0 %v1035
        %1069 = vmatprep.subr.mxu0 %v1038
        %1070 = vmatpush1.msra.mxu0 %v1037
        %1071 = vmatprep.subr.mxu0 %v1040
        %1072 = vmatpush1.msra.mxu0 %v1039
        %1073 = vmatprep.subr.mxu0 %v1042
        %1074 = vmatpush1.msra.mxu0 %v1041
        %1075 = vmatprep.subr.mxu0 %v1044
        %1076 = vmatpush1.msra.mxu0 %v1043
        %1077 = vmatprep.subr.mxu0 %v1046
        %1078 = vmatpush1.msra.mxu0 %v1045
        %1079 = vmatprep.subr.mxu0 %v1048
        %1080 = vmatpush1.msra.mxu0 %v1047
        %1081 = vmatprep.subr.mxu0 %v1050
        %1082 = vmatpush1.msra.mxu0 %v1049
        %1083 = vmatprep.subr.mxu0 %v1052
        %1084 = vmatpush1.msra.mxu0 %v1051
        %1085 = vmatprep.subr.mxu0 %v1054
        %1086 = vmatpush1.msra.mxu0 %v1053
        %1087 = vmatprep.subr.mxu0 %v1056
        %1088 = vmatpush1.msra.mxu0 %v1055
        %1089 = vmatprep.subr.mxu0 %v1058
        %1090 = vmatpush1.msra.mxu0 %v1057
        %1091 = vmatprep.subr.mxu0 0.0
        %1092 = vmatpush1.msra.mxu0 0.0
        %1093 = vmatprep.subr.mxu0 0.0
        %1094 = vmatpush1.msra.mxu0 0.0
        %1095 = vmatprep.subr.mxu0 0.0
        %1096 = vmatpush1.msra.mxu0 0.0
        %1097 = vmatprep.subr.mxu0 0.0
        %1098 = vmatpush1.msra.mxu0 0.0
        %1099 = vmatprep.subr.mxu0 0.0
        %1100 = vmatpush1.msra.mxu0 0.0
        %1101 = vmatprep.subr.mxu0 0.0
        %1102 = vmatpush1.msra.mxu0 0.0
        %1103 = vmatprep.subr.mxu0 0.0
        %1104 = vmatpush1.msra.mxu0 0.0
        %1105 = vmatprep.subr.mxu0 0.0
        %1106 = vmatpush1.msra.mxu0 0.0
        %1107 = vmatprep.subr.mxu0 0.0
        %1108 = vmatpush1.msra.mxu0 0.0
        %1109 = vmatprep.subr.mxu0 0.0
        %1110 = vmatpush1.msra.mxu0 0.0
        %1111 = vmatprep.subr.mxu0 0.0
        %1112 = vmatpush1.msra.mxu0 0.0
        %1113 = vmatprep.subr.mxu0 0.0
        %1114 = vmatpush1.msra.mxu0 0.0
        %1115 = vmatprep.subr.mxu0 0.0
        %1116 = vmatpush1.msra.mxu0 0.0
        %1117 = vmatprep.subr.mxu0 0.0
        %1118 = vmatpush1.msra.mxu0 0.0
        %1119 = vmatprep.subr.mxu0 0.0
        %1120 = vmatpush1.msra.mxu0 0.0
        %1121 = vmatprep.subr.mxu0 0.0
        %1122 = vmatpush1.msra.mxu0 0.0
        %1123 = vmatprep.mubr.f32.mxu0 0.0
        %1124 = vmatmul.mubr.f32.gmra.mrb[0].mxu0 %v1025
        %v1125 = vpop.f32.mrb[0].mxu0
        %v1126 = vadd.f32 0.0, %v1125
        %v1127 = vpop.f32.mrb[0].mxu0
        %v1128 = vadd.f32 0.0, %v1127
        %1129 = vmatprep.mubr.f32.mxu0 0.0
        %1130 = vmatmul.mubr.f32.gmra.mrb[0].mxu0 %v1026
        %v1131 = vpop.f32.mrb[0].mxu0
        %v1132 = vadd.f32 0.0, %v1131
        %v1133 = vpop.f32.mrb[0].mxu0
        %v1134 = vadd.f32 0.0, %v1133
        %1135 = vdwg.mxu0
        %p1136 = scmp.eq.s32.totalorder %s39, 0
        // Predicated region
        $region93: #{tpu_custom_call.1} parent=55 // pred_check
          %p1137 = pneg %p1136
        $region94: #{tpu_custom_call.1} parent=55 // pred_check_branch
          %1139 = sbr.rel (%p1137) target = $region96
        $region95: #{tpu_custom_call.1} parent=55 // pred_region
          %v1140 = vld [vmem:[#allocation17] sm:$0x3]
          %v1142 = vlaneseq
          %v1143 = vshrl.u32 %v1142, 7
          %v1144 = vsub.s32 0, %v1143
          %v1145 = vrot.slane %v1140, %v1144
          %v1146 = vlaneseq
          %v1147 = vshrl.u32 %v1146, 7
          %v1148 = vsub.s32 1, %v1147
          %v1149 = vrot.slane %v1140, %v1148
          %1152 = vst [vmem:[#allocation2] sm:$0xff] %v1145
          %1153 = vst [vmem:[#allocation2 + $0x8] sm:$0xff] %v1149
          %1154 = vst [vmem:[#allocation2 + $0x10] sm:$0xff] %v1145
          %1155 = vst [vmem:[#allocation2 + $0x18] sm:$0xff] %v1149
        $region96: #{tpu_custom_call.1} parent=55 // pred_fallthru
          _
        %v1156 = vld [vmem:[#allocation2] sm:$0xff]
        %v1157 = vld [vmem:[#allocation2 + $0x8] sm:$0xff]
        %v1158 = vld [vmem:[#allocation2 + $0x10] sm:$0xff]
        %v1159 = vld [vmem:[#allocation2 + $0x18] sm:$0xff]
        %v1160 = vadd.f32 %v1156, %v1126
        %v1161 = vadd.f32 %v1157, %v1128
        %v1162 = vadd.f32 %v1158, %v1132
        %v1163 = vadd.f32 %v1159, %v1134
        %1164 = vst [vmem:[#allocation2] sm:$0xff] %v1160
        %1165 = vst [vmem:[#allocation2 + $0x8] sm:$0xff] %v1161
        %1166 = vst [vmem:[#allocation2 + $0x10] sm:$0xff] %v1162
        %1167 = vst [vmem:[#allocation2 + $0x18] sm:$0xff] %v1163
        %p1168 = scmp.eq.s32.totalorder %s39, 1
        // Predicated region
        $region97: #{tpu_custom_call.1} parent=55 // pred_check
          %p1169 = pneg %p1168
        $region98: #{tpu_custom_call.1} parent=55 // pred_check_branch
          %1171 = sbr.rel (%p1169) target = $region100
        $region99: #{tpu_custom_call.1} parent=55 // pred_region
          %v1172 = vld [vmem:[#allocation2] sm:$0xff]
          %v1173 = vld [vmem:[#allocation2 + $0x8] sm:$0xff]
          %v1174 = vld [vmem:[#allocation2 + $0x10] sm:$0xff]
          %v1175 = vld [vmem:[#allocation2 + $0x18] sm:$0xff]
          %1176 = vst [vmem:[%s548] sm:$0xff] %v1172
          %1177 = vst [vmem:[%s548 + $0x8] sm:$0xff] %v1173
          %1178 = vst [vmem:[%s548 + $0x10] sm:$0xff] %v1174
          %1179 = vst [vmem:[%s548 + $0x18] sm:$0xff] %v1175
        $region100: #{tpu_custom_call.1} parent=55 // pred_fallthru
          _
        %s1180 = sand.u32 %s263, 1
        %s1181 = scalar_lea.sflag [#allocation5], %s1180
        %s1182 = sand.u32 %s263, 1
        %s1183 = smul.addr %s1182, 32
        %s1184 = scalar_lea.vmem [#allocation18], %s1183
        // Predicated region
        $region101: #{tpu_custom_call.1} parent=55 // pred_check
          %p1185 = pneg %p273
        $region102: #{tpu_custom_call.1} parent=55 // pred_check_branch
          %1187 = sbr.rel (%p1185) target = $region104
        $region103: #{tpu_custom_call.1} parent=55 // pred_region
          %s1189 = ssub.s32 512, 512
          %1190 = vsyncadd %s1181, %s1189
          %s1191 = smul.addr %s38, 4
          %s1192 = smul.addr %s1191, 128
          %s1193 = scalar_lea.hbm %s9, %s1192
          %s1194 = sshll.u32 %s1184, 4
          %s1195 = int_to_ptr.vmem [resolvable:$true] %s1194
          %1200 = dma.vmem_to_hbm [thread:$0]  %s1195, 512, %s1193, %s1181, 256, 256, 16
        $region104: #{tpu_custom_call.1} parent=55 // pred_fallthru
          _
      $region56: #{tpu_custom_call.1} parent=5 // pred_fallthru
        _
      %p1201 = scmp.le.s32.totalorder 2, %s29
      // Predicated region
      $region105: #{tpu_custom_call.1} parent=5 // pred_check
        %p1202 = pneg %p1201
      $region106: #{tpu_custom_call.1} parent=5 // pred_check_branch
        %1204 = sbr.rel (%p1202) target = $region108
      $region107: #{tpu_custom_call.1} parent=5 // pred_region
        %s1205 = ssub.s32 %s29, 2
        // Predicated region
        $region109: #{tpu_custom_call.1} parent=107 // pred_check
          %p1206 = pneg %p279
        $region110: #{tpu_custom_call.1} parent=107 // pred_check_branch
          %1208 = sbr.rel (%p1206) target = $region112
        $region111: #{tpu_custom_call.1} parent=107 // pred_region
          %s1209 = sand.u32 %s264, 1
          %s1210 = scalar_lea.sflag [#allocation5], %s1209
          %s1211 = sand.u32 %s264, 1
          %s1212 = smul.addr %s1211, 32
          %s1213 = scalar_lea.vmem [#allocation18], %s1212
          %1214 = dma.done %s1210, 512
        $region112: #{tpu_custom_call.1} parent=107 // pred_fallthru
          _
      $region108: #{tpu_custom_call.1} parent=5 // pred_fallthru
        _
    $region6: #{tpu_custom_call.1} parent=1 // loop_footer
      %s33 = sadd.s32 1, %s29
    $region7: #{tpu_custom_call.1} parent=1 // loop_footer_branch
      %28 = sbr.rel target = $region3
    $region8: #{tpu_custom_call.1} parent=1 // loop_exit
      _
    %1215 = vsyncpa [#allocation4], 1
    %s1216 = scalar_lea.sflag [#allocation4], 1
    %1217 = vsyncpa %s1216, 1
    %1218 = vsyncpa [#allocation7], 1
    %s1219 = scalar_lea.sflag [#allocation7], 1
    %1220 = vsyncpa %s1219, 1
    %1221 = vsyncpa [#allocation10], 1
    %1222 = vsyncpa [#allocation13], 1
    %1223 = vsyncpa [#allocation16], 1
    %s1224 = scalar_lea.sflag [#allocation16], 1
    %1225 = vsyncpa %s1224, 1
    %1226 = vsyncpa [#allocation5], 1
    %s1227 = scalar_lea.sflag [#allocation5], 1
    %1228 = vsyncpa %s1227, 1

</llo_original>
